<compile_context>
chip_gen: v7x
topology: tpu7x:2x2x1
jax: 0.10.0
libtpu: 0.0.40
codegen_flags: <defaults>
</compile_context>

<pallas_src>
import math
import functools

import jax
import jax.numpy as jnp
from jax import lax
from jax.experimental import pallas as pl
from jax.experimental.pallas import tpu as pltpu


# ----------------------------------------------------------------------------
# Fused multi-head attention kernel: one grid step = one batch element.
# Full-width projections, per-head softmax, single merged out-projection.
# ----------------------------------------------------------------------------
def _fused_mha_kernel(q_ref, kv_ref, wq_ref, wkv_ref, bq_ref, bkv_ref,
                      wo_ref, bo_ref, out_ref, *rest,
                      n_head, scale, return_w):
    if return_w:
        w_ref, q_s, kv_s, o_s = rest
    else:
        q_s, kv_s, o_s = rest

    x_q = q_ref[0]                          # (Tq, E)
    x_kv = kv_ref[0]                        # (Tk, E)
    E = x_q.shape[-1]
    Dh = E // n_head
    mm_dtype = q_s.dtype                    # MXU operand dtype (f32 or bf16)

    # ---- full-width in-projections (MXU lane-filling), f32 accumulation ------
    q = jnp.dot(x_q, wq_ref[...], preferred_element_type=jnp.float32) + bq_ref[...]
    q_s[...] = (q * scale).astype(mm_dtype)          # fold 1/sqrt(Dh) into q once
    kv = jnp.dot(x_kv, wkv_ref[...], preferred_element_type=jnp.float32) + bkv_ref[...]
    kv_s[...] = kv.astype(mm_dtype)                  # packed [K | V] columns

    inv_h = 1.0 / n_head
    for h in range(n_head):                 # static unroll; H is small
        q_h = q_s[:, h * Dh:(h + 1) * Dh]                    # (Tq, Dh)
        k_h = kv_s[:, h * Dh:(h + 1) * Dh]                   # (Tk, Dh)
        v_h = kv_s[:, E + h * Dh:E + (h + 1) * Dh]           # (Tk, Dh)

        # scores: contract last dims directly (no explicit transpose)
        s = lax.dot_general(q_h, k_h, (((1,), (1,)), ((), ())),
                            preferred_element_type=jnp.float32)   # (Tq, Tk)

        # numerically-stable softmax, all f32 elementwise (VPU/EUP safe on v5e);
        # reciprocal on the EUP slot + one Newton refinement keeps f32 tolerance.
        m = jnp.max(s, axis=-1, keepdims=True)
        p = jnp.exp(s - m)
        denom = jnp.sum(p, axis=-1, keepdims=True)
        r = pl.reciprocal(denom, approx=True)
        r = r * (2.0 - denom * r)
        p = p * r                                               # (Tq, Tk)

        # per-head attention output, written into the merged-heads scratch slab
        o_h = jnp.dot(p.astype(mm_dtype), v_h,
                      preferred_element_type=jnp.float32)        # (Tq, Dh)
        o_s[:, h * Dh:(h + 1) * Dh] = o_h.astype(mm_dtype)

        if return_w:                       # PyTorch default: head-averaged weights
            if h == 0:
                w_ref[0] = p * inv_h
            else:
                w_ref[0] = w_ref[0] + p * inv_h

    # ---- single merged out-projection: (Tq,E)x(E,E) fills contraction depth --
    out = jnp.dot(o_s[...], wo_ref[...], preferred_element_type=jnp.float32)
    out_ref[0] = (out + bo_ref[...]).astype(out_ref.dtype)


# ----------------------------------------------------------------------------
# Wrapper: single pallas_call for the whole forward pass.
# ----------------------------------------------------------------------------
def self_attention_forward(query, kv_cross, params, n_head,
                           return_attn_weights=False,
                           matmul_dtype=jnp.float32):
    B, Tq, E = query.shape
    Tk = kv_cross.shape[1]
    Dh = E // n_head
    scale = 1.0 / math.sqrt(Dh)

    # One-time, tiny host-side packing: K and V projection weights side by side so
    # the kernel does a single full-width x_kv @ [W_k | W_v] dot.
    w_kv = jnp.concatenate([params["w_k"], params["w_v"]], axis=1)        # (E, 2E)
    b_kv = jnp.concatenate([params["b_k"], params["b_v"]]).reshape(1, 2 * E)
    w_q = params["w_q"]                                                   # (E, E)
    b_q = params["b_q"].reshape(1, E)
    w_o = params["w_o"]                                                   # (E, E)
    b_o = params["b_o"].reshape(1, E)

    # bf16 MXU-operand path (v6e/v7x recommended): cast activations + weights;
    # biases stay f32 (added to the f32-accumulated dot results).
    mm = matmul_dtype
    query_c = query.astype(mm)
    kv_c = kv_cross.astype(mm)
    w_q = w_q.astype(mm)
    w_kv = w_kv.astype(mm)
    w_o = w_o.astype(mm)

    kernel = functools.partial(_fused_mha_kernel, n_head=n_head, scale=scale,
                               return_w=return_attn_weights)

    in_specs = [
        pl.BlockSpec((1, Tq, E), lambda b: (b, 0, 0)),     # query    (per-batch tile)
        pl.BlockSpec((1, Tk, E), lambda b: (b, 0, 0)),     # kv_cross (per-batch tile)
        pl.BlockSpec((E, E), lambda b: (0, 0)),            # W_q
        pl.BlockSpec((E, 2 * E), lambda b: (0, 0)),        # [W_k | W_v]
        pl.BlockSpec((1, E), lambda b: (0, 0)),            # b_q
        pl.BlockSpec((1, 2 * E), lambda b: (0, 0)),        # [b_k | b_v]
        pl.BlockSpec((E, E), lambda b: (0, 0)),            # W_o
        pl.BlockSpec((1, E), lambda b: (0, 0)),            # b_o
    ]

    out_specs = [pl.BlockSpec((1, Tq, E), lambda b: (b, 0, 0))]
    out_shape = [jax.ShapeDtypeStruct((B, Tq, E), jnp.float32)]
    if return_attn_weights:
        out_specs.append(pl.BlockSpec((1, Tq, Tk), lambda b: (b, 0, 0)))
        out_shape.append(jax.ShapeDtypeStruct((B, Tq, Tk), jnp.float32))

    scratch_shapes = [
        pltpu.VMEM((Tq, E), mm),        # scaled Q  (full width, all heads)
        pltpu.VMEM((Tk, 2 * E), mm),    # packed [K | V]
        pltpu.VMEM((Tq, E), mm),        # merged per-head outputs -> W_o input
    ]

    outs = pl.pallas_call(
        kernel,
        grid=(B,),
        in_specs=in_specs,
        out_specs=out_specs,
        out_shape=out_shape,
        scratch_shapes=scratch_shapes,
        compiler_params=pltpu.CompilerParams(
            dimension_semantics=("parallel",),
            vmem_limit_bytes=48 * 1024 * 1024,   # > default scoped, < v7x physical
        ),
    )(query_c, kv_c, w_q, w_kv, b_q, b_kv, w_o, b_o)

    if return_attn_weights:
        return outs[0], outs[1]
    return outs[0]


# ----------------------------------------------------------------------------
# Pure-JAX reference (correctness check for the Pallas path)
# ----------------------------------------------------------------------------
def reference_forward(query, kv_cross, params, n_head, return_attn_weights=False):
    B, Tq, E = query.shape
    Tk = kv_cross.shape[1]
    Dh = E // n_head
    q = query @ params["w_q"] + params["b_q"]
    k = kv_cross @ params["w_k"] + params["b_k"]
    v = kv_cross @ params["w_v"] + params["b_v"]
    q = q.reshape(B, Tq, n_head, Dh).transpose(0, 2, 1, 3)
    k = k.reshape(B, Tk, n_head, Dh).transpose(0, 2, 1, 3)
    v = v.reshape(B, Tk, n_head, Dh).transpose(0, 2, 1, 3)
    s = jnp.einsum("bhqd,bhkd->bhqk", q, k) / math.sqrt(Dh)
    p = jax.nn.softmax(s, axis=-1)
    o = jnp.einsum("bhqk,bhkd->bhqd", p, v)
    o = o.transpose(0, 2, 1, 3).reshape(B, Tq, E)
    out = o @ params["w_o"] + params["b_o"]
    if return_attn_weights:
        return out, jnp.mean(p, axis=1)
    return out


if __name__ == "__main__":
    # cfg: n_embd=32, n_head=4, dropout=0.0 (eval -> no-op), qkv_bias=True
    B, Tq, Tk, E, H = 2, 8, 8, 32, 4

    key = jax.random.PRNGKey(0)
    keys = jax.random.split(key, 10)
    sc = 0.02
    params = {
        "w_q": sc * jax.random.normal(keys[0], (E, E), jnp.float32),
        "w_k": sc * jax.random.normal(keys[1], (E, E), jnp.float32),
        "w_v": sc * jax.random.normal(keys[2], (E, E), jnp.float32),
        "w_o": sc * jax.random.normal(keys[3], (E, E), jnp.float32),
        "b_q": sc * jax.random.normal(keys[4], (E,), jnp.float32),
        "b_k": sc * jax.random.normal(keys[5], (E,), jnp.float32),
        "b_v": sc * jax.random.normal(keys[6], (E,), jnp.float32),
        "b_o": sc * jax.random.normal(keys[7], (E,), jnp.float32),
    }
    query = jax.random.normal(keys[8], (B, Tq, E), jnp.float32)
    kv_cross = jax.random.normal(keys[9], (B, Tk, E), jnp.float32)

    ref = reference_forward(query, kv_cross, params, n_head=H)
    ref_o, ref_w = reference_forward(query, kv_cross, params, n_head=H,
                                     return_attn_weights=True)

    # Hot path: f32 operands, no attention weights.
    out = self_attention_forward(query, kv_cross, params, n_head=H)
    out = jax.block_until_ready(out)
    assert out.shape == (B, Tq, E)
    assert jnp.allclose(out, ref, rtol=1e-4, atol=1e-5), "attention output mismatch"

    # Optional path: head-averaged attention weights (PyTorch default averaging).
    out_w, w = self_attention_forward(query, kv_cross, params, n_head=H,
                                      return_attn_weights=True)
    out_w, w = jax.block_until_ready((out_w, w))
    assert w.shape == (B, Tq, Tk)
    assert jnp.allclose(out_w, ref_o, rtol=1e-4, atol=1e-5)
    assert jnp.allclose(w, ref_w, rtol=1e-4, atol=1e-5)

    # bf16 MXU-operand path (v6e/v7x fast path): relaxed tolerance vs f32 reference.
    out_bf = self_attention_forward(query, kv_cross, params, n_head=H,
                                    matmul_dtype=jnp.bfloat16)
    out_bf = jax.block_until_ready(out_bf)
    assert jnp.allclose(out_bf, ref, rtol=5e-2, atol=5e-3), "bf16 path mismatch"

    print("KERNEL_OK")
</pallas_src>

<mosaic_0001>
module attributes {stable_mosaic.version = 11 : i64} {
  func.func @_fused_mha_kernel(%arg0: i32, %arg1: memref<1x8x32xf32, #tpu.memory_space<vmem>>, %arg2: memref<1x8x32xf32, #tpu.memory_space<vmem>>, %arg3: memref<32x32xf32, #tpu.memory_space<vmem>>, %arg4: memref<32x64xf32, #tpu.memory_space<vmem>>, %arg5: memref<1x32xf32, #tpu.memory_space<vmem>>, %arg6: memref<1x64xf32, #tpu.memory_space<vmem>>, %arg7: memref<32x32xf32, #tpu.memory_space<vmem>>, %arg8: memref<1x32xf32, #tpu.memory_space<vmem>>, %arg9: memref<1x8x32xf32, #tpu.memory_space<vmem>>, %arg10: memref<8x32xf32, #tpu.memory_space<vmem>>, %arg11: memref<8x64xf32, #tpu.memory_space<vmem>>, %arg12: memref<8x32xf32, #tpu.memory_space<vmem>>) attributes {dimension_semantics = [#tpu.dimension_semantics<parallel>], iteration_bounds = array<i64: 2>, scalar_prefetch = 0 : i64, scratch_operands = 3 : i64, tpu.core_type = #tpu.core_type<tc>, window_params = [{transform_indices = @transform_0, window_bounds = array<i64: 1, 8, 32>}, {transform_indices = @transform_1, window_bounds = array<i64: 1, 8, 32>}, {pipeline_mode = #tpu.pipeline_mode<synchronous>, transform_indices = @transform_2, window_bounds = array<i64: 32, 32>}, {pipeline_mode = #tpu.pipeline_mode<synchronous>, transform_indices = @transform_3, window_bounds = array<i64: 32, 64>}, {pipeline_mode = #tpu.pipeline_mode<synchronous>, transform_indices = @transform_4, window_bounds = array<i64: 1, 32>}, {pipeline_mode = #tpu.pipeline_mode<synchronous>, transform_indices = @transform_5, window_bounds = array<i64: 1, 64>}, {pipeline_mode = #tpu.pipeline_mode<synchronous>, transform_indices = @transform_6, window_bounds = array<i64: 32, 32>}, {pipeline_mode = #tpu.pipeline_mode<synchronous>, transform_indices = @transform_7, window_bounds = array<i64: 1, 32>}, {transform_indices = @transform_8, window_bounds = array<i64: 1, 8, 32>}]} {
    %c0 = arith.constant 0 : index
    %c0_0 = arith.constant 0 : index
    %c0_1 = arith.constant 0 : index
    %0 = vector.load %arg1[%c0, %c0_0, %c0_1] : memref<1x8x32xf32, #tpu.memory_space<vmem>>, vector<1x8x32xf32>
    %1 = vector.shape_cast %0 : vector<1x8x32xf32> to vector<8x32xf32>
    %c0_2 = arith.constant 0 : index
    %c0_3 = arith.constant 0 : index
    %c0_4 = arith.constant 0 : index
    %2 = vector.load %arg2[%c0_2, %c0_3, %c0_4] : memref<1x8x32xf32, #tpu.memory_space<vmem>>, vector<1x8x32xf32>
    %3 = vector.shape_cast %2 : vector<1x8x32xf32> to vector<8x32xf32>
    %c0_5 = arith.constant 0 : index
    %c0_6 = arith.constant 0 : index
    %4 = vector.load %arg3[%c0_5, %c0_6] : memref<32x32xf32, #tpu.memory_space<vmem>>, vector<32x32xf32>
    %cst = arith.constant dense<0.000000e+00> : vector<8x32xf32>
    %5 = tpu.matmul %1, %4, %cst {dimension_numbers = #tpu.dot_dimension_numbers<[1], [0], [0], [1], [0, 0, 1, 1], [], []>} : vector<8x32xf32>, vector<32x32xf32>, vector<8x32xf32> -> vector<8x32xf32>
    %c0_7 = arith.constant 0 : index
    %c0_8 = arith.constant 0 : index
    %6 = vector.load %arg5[%c0_7, %c0_8] : memref<1x32xf32, #tpu.memory_space<vmem>>, vector<1x32xf32>
    %7 = vector.broadcast %6 : vector<1x32xf32> to vector<8x32xf32>
    %8 = arith.addf %5, %7 : vector<8x32xf32>
    %cst_9 = arith.constant 0.353553385 : f32
    %9 = vector.broadcast %cst_9 : f32 to vector<8x32xf32>
    %10 = arith.mulf %8, %9 : vector<8x32xf32>
    %c0_10 = arith.constant 0 : index
    %c0_11 = arith.constant 0 : index
    %11 = vector.load %arg10[%c0_10, %c0_11] : memref<8x32xf32, #tpu.memory_space<vmem>>, vector<8x32xf32>
    tpu.vector_store %arg10[%c0_10, %c0_11], %10 {strides = array<i32>} : memref<8x32xf32, #tpu.memory_space<vmem>>, vector<8x32xf32>,
    %c0_12 = arith.constant 0 : index
    %c0_13 = arith.constant 0 : index
    %12 = vector.load %arg4[%c0_12, %c0_13] : memref<32x64xf32, #tpu.memory_space<vmem>>, vector<32x64xf32>
    %cst_14 = arith.constant dense<0.000000e+00> : vector<8x64xf32>
    %13 = tpu.matmul %3, %12, %cst_14 {dimension_numbers = #tpu.dot_dimension_numbers<[1], [0], [0], [1], [0, 0, 1, 1], [], []>} : vector<8x32xf32>, vector<32x64xf32>, vector<8x64xf32> -> vector<8x64xf32>
    %c0_15 = arith.constant 0 : index
    %c0_16 = arith.constant 0 : index
    %14 = vector.load %arg6[%c0_15, %c0_16] : memref<1x64xf32, #tpu.memory_space<vmem>>, vector<1x64xf32>
    %15 = vector.broadcast %14 : vector<1x64xf32> to vector<8x64xf32>
    %16 = arith.addf %13, %15 : vector<8x64xf32>
    %c0_17 = arith.constant 0 : index
    %c0_18 = arith.constant 0 : index
    %17 = vector.load %arg11[%c0_17, %c0_18] : memref<8x64xf32, #tpu.memory_space<vmem>>, vector<8x64xf32>
    tpu.vector_store %arg11[%c0_17, %c0_18], %16 {strides = array<i32>} : memref<8x64xf32, #tpu.memory_space<vmem>>, vector<8x64xf32>,
    %c0_19 = arith.constant 0 : index
    %c0_20 = arith.constant 0 : index
    %18 = vector.load %arg10[%c0_19, %c0_20] : memref<8x32xf32, #tpu.memory_space<vmem>>, vector<8x8xf32>
    %c0_21 = arith.constant 0 : index
    %c0_22 = arith.constant 0 : index
    %19 = vector.load %arg11[%c0_21, %c0_22] : memref<8x64xf32, #tpu.memory_space<vmem>>, vector<8x8xf32>
    %c0_23 = arith.constant 0 : index
    %c32 = arith.constant 32 : index
    %20 = vector.load %arg11[%c0_23, %c32] : memref<8x64xf32, #tpu.memory_space<vmem>>, vector<8x8xf32>
    %cst_24 = arith.constant dense<0.000000e+00> : vector<8x8xf32>
    %21 = tpu.matmul %18, %19, %cst_24 {dimension_numbers = #tpu.dot_dimension_numbers<[1], [1], [0], [0], [0, 0, 1, 0], [], []>} : vector<8x8xf32>, vector<8x8xf32>, vector<8x8xf32> -> vector<8x8xf32>
    %cst_25 = arith.constant dense<0xFF800000> : vector<8xf32>
    %22 = vector.multi_reduction <maximumf>, %21, %cst_25 [1] : vector<8x8xf32> to vector<8xf32>
    %23 = vector.shape_cast %22 : vector<8xf32> to vector<8x1xf32>
    %24 = vector.broadcast %23 : vector<8x1xf32> to vector<8x8xf32>
    %25 = arith.subf %21, %24 : vector<8x8xf32>
    %26 = math.exp %25 : vector<8x8xf32>
    %cst_26 = arith.constant dense<0.000000e+00> : vector<8xf32>
    %27 = vector.multi_reduction <add>, %26, %cst_26 [1] : vector<8x8xf32> to vector<8xf32>
    %28 = vector.shape_cast %27 : vector<8xf32> to vector<8x1xf32>
    %29 = tpu.reciprocal %28 {approx = true} : vector<8x1xf32> -> vector<8x1xf32>
    %30 = arith.mulf %28, %29 : vector<8x1xf32>
    %cst_27 = arith.constant 2.000000e+00 : f32
    %31 = vector.broadcast %cst_27 : f32 to vector<8x1xf32>
    %32 = arith.subf %31, %30 : vector<8x1xf32>
    %33 = arith.mulf %29, %32 : vector<8x1xf32>
    %34 = vector.broadcast %33 : vector<8x1xf32> to vector<8x8xf32>
    %35 = arith.mulf %26, %34 : vector<8x8xf32>
    %cst_28 = arith.constant dense<0.000000e+00> : vector<8x8xf32>
    %36 = tpu.matmul %35, %20, %cst_28 {dimension_numbers = #tpu.dot_dimension_numbers<[1], [0], [0], [1], [0, 0, 1, 1], [], []>} : vector<8x8xf32>, vector<8x8xf32>, vector<8x8xf32> -> vector<8x8xf32>
    %c0_29 = arith.constant 0 : index
    %c0_30 = arith.constant 0 : index
    %37 = vector.load %arg12[%c0_29, %c0_30] : memref<8x32xf32, #tpu.memory_space<vmem>>, vector<8x8xf32>
    tpu.vector_store %arg12[%c0_29, %c0_30], %36 {strides = array<i32>} : memref<8x32xf32, #tpu.memory_space<vmem>>, vector<8x8xf32>,
    %c0_31 = arith.constant 0 : index
    %c8 = arith.constant 8 : index
    %38 = vector.load %arg10[%c0_31, %c8] : memref<8x32xf32, #tpu.memory_space<vmem>>, vector<8x8xf32>
    %c0_32 = arith.constant 0 : index
    %c8_33 = arith.constant 8 : index
    %39 = vector.load %arg11[%c0_32, %c8_33] : memref<8x64xf32, #tpu.memory_space<vmem>>, vector<8x8xf32>
    %c0_34 = arith.constant 0 : index
    %c40 = arith.constant 40 : index
    %40 = vector.load %arg11[%c0_34, %c40] : memref<8x64xf32, #tpu.memory_space<vmem>>, vector<8x8xf32>
    %cst_35 = arith.constant dense<0.000000e+00> : vector<8x8xf32>
    %41 = tpu.matmul %38, %39, %cst_35 {dimension_numbers = #tpu.dot_dimension_numbers<[1], [1], [0], [0], [0, 0, 1, 0], [], []>} : vector<8x8xf32>, vector<8x8xf32>, vector<8x8xf32> -> vector<8x8xf32>
    %cst_36 = arith.constant dense<0xFF800000> : vector<8xf32>
    %42 = vector.multi_reduction <maximumf>, %41, %cst_36 [1] : vector<8x8xf32> to vector<8xf32>
    %43 = vector.shape_cast %42 : vector<8xf32> to vector<8x1xf32>
    %44 = vector.broadcast %43 : vector<8x1xf32> to vector<8x8xf32>
    %45 = arith.subf %41, %44 : vector<8x8xf32>
    %46 = math.exp %45 : vector<8x8xf32>
    %cst_37 = arith.constant dense<0.000000e+00> : vector<8xf32>
    %47 = vector.multi_reduction <add>, %46, %cst_37 [1] : vector<8x8xf32> to vector<8xf32>
    %48 = vector.shape_cast %47 : vector<8xf32> to vector<8x1xf32>
    %49 = tpu.reciprocal %48 {approx = true} : vector<8x1xf32> -> vector<8x1xf32>
    %50 = arith.mulf %48, %49 : vector<8x1xf32>
    %cst_38 = arith.constant 2.000000e+00 : f32
    %51 = vector.broadcast %cst_38 : f32 to vector<8x1xf32>
    %52 = arith.subf %51, %50 : vector<8x1xf32>
    %53 = arith.mulf %49, %52 : vector<8x1xf32>
    %54 = vector.broadcast %53 : vector<8x1xf32> to vector<8x8xf32>
    %55 = arith.mulf %46, %54 : vector<8x8xf32>
    %cst_39 = arith.constant dense<0.000000e+00> : vector<8x8xf32>
    %56 = tpu.matmul %55, %40, %cst_39 {dimension_numbers = #tpu.dot_dimension_numbers<[1], [0], [0], [1], [0, 0, 1, 1], [], []>} : vector<8x8xf32>, vector<8x8xf32>, vector<8x8xf32> -> vector<8x8xf32>
    %c0_40 = arith.constant 0 : index
    %c8_41 = arith.constant 8 : index
    %57 = vector.load %arg12[%c0_40, %c8_41] : memref<8x32xf32, #tpu.memory_space<vmem>>, vector<8x8xf32>
    tpu.vector_store %arg12[%c0_40, %c8_41], %56 {strides = array<i32>} : memref<8x32xf32, #tpu.memory_space<vmem>>, vector<8x8xf32>,
    %c0_42 = arith.constant 0 : index
    %c16 = arith.constant 16 : index
    %58 = vector.load %arg10[%c0_42, %c16] : memref<8x32xf32, #tpu.memory_space<vmem>>, vector<8x8xf32>
    %c0_43 = arith.constant 0 : index
    %c16_44 = arith.constant 16 : index
    %59 = vector.load %arg11[%c0_43, %c16_44] : memref<8x64xf32, #tpu.memory_space<vmem>>, vector<8x8xf32>
    %c0_45 = arith.constant 0 : index
    %c48 = arith.constant 48 : index
    %60 = vector.load %arg11[%c0_45, %c48] : memref<8x64xf32, #tpu.memory_space<vmem>>, vector<8x8xf32>
    %cst_46 = arith.constant dense<0.000000e+00> : vector<8x8xf32>
    %61 = tpu.matmul %58, %59, %cst_46 {dimension_numbers = #tpu.dot_dimension_numbers<[1], [1], [0], [0], [0, 0, 1, 0], [], []>} : vector<8x8xf32>, vector<8x8xf32>, vector<8x8xf32> -> vector<8x8xf32>
    %cst_47 = arith.constant dense<0xFF800000> : vector<8xf32>
    %62 = vector.multi_reduction <maximumf>, %61, %cst_47 [1] : vector<8x8xf32> to vector<8xf32>
    %63 = vector.shape_cast %62 : vector<8xf32> to vector<8x1xf32>
    %64 = vector.broadcast %63 : vector<8x1xf32> to vector<8x8xf32>
    %65 = arith.subf %61, %64 : vector<8x8xf32>
    %66 = math.exp %65 : vector<8x8xf32>
    %cst_48 = arith.constant dense<0.000000e+00> : vector<8xf32>
    %67 = vector.multi_reduction <add>, %66, %cst_48 [1] : vector<8x8xf32> to vector<8xf32>
    %68 = vector.shape_cast %67 : vector<8xf32> to vector<8x1xf32>
    %69 = tpu.reciprocal %68 {approx = true} : vector<8x1xf32> -> vector<8x1xf32>
    %70 = arith.mulf %68, %69 : vector<8x1xf32>
    %cst_49 = arith.constant 2.000000e+00 : f32
    %71 = vector.broadcast %cst_49 : f32 to vector<8x1xf32>
    %72 = arith.subf %71, %70 : vector<8x1xf32>
    %73 = arith.mulf %69, %72 : vector<8x1xf32>
    %74 = vector.broadcast %73 : vector<8x1xf32> to vector<8x8xf32>
    %75 = arith.mulf %66, %74 : vector<8x8xf32>
    %cst_50 = arith.constant dense<0.000000e+00> : vector<8x8xf32>
    %76 = tpu.matmul %75, %60, %cst_50 {dimension_numbers = #tpu.dot_dimension_numbers<[1], [0], [0], [1], [0, 0, 1, 1], [], []>} : vector<8x8xf32>, vector<8x8xf32>, vector<8x8xf32> -> vector<8x8xf32>
    %c0_51 = arith.constant 0 : index
    %c16_52 = arith.constant 16 : index
    %77 = vector.load %arg12[%c0_51, %c16_52] : memref<8x32xf32, #tpu.memory_space<vmem>>, vector<8x8xf32>
    tpu.vector_store %arg12[%c0_51, %c16_52], %76 {strides = array<i32>} : memref<8x32xf32, #tpu.memory_space<vmem>>, vector<8x8xf32>,
    %c0_53 = arith.constant 0 : index
    %c24 = arith.constant 24 : index
    %78 = vector.load %arg10[%c0_53, %c24] : memref<8x32xf32, #tpu.memory_space<vmem>>, vector<8x8xf32>
    %c0_54 = arith.constant 0 : index
    %c24_55 = arith.constant 24 : index
    %79 = vector.load %arg11[%c0_54, %c24_55] : memref<8x64xf32, #tpu.memory_space<vmem>>, vector<8x8xf32>
    %c0_56 = arith.constant 0 : index
    %c56 = arith.constant 56 : index
    %80 = vector.load %arg11[%c0_56, %c56] : memref<8x64xf32, #tpu.memory_space<vmem>>, vector<8x8xf32>
    %cst_57 = arith.constant dense<0.000000e+00> : vector<8x8xf32>
    %81 = tpu.matmul %78, %79, %cst_57 {dimension_numbers = #tpu.dot_dimension_numbers<[1], [1], [0], [0], [0, 0, 1, 0], [], []>} : vector<8x8xf32>, vector<8x8xf32>, vector<8x8xf32> -> vector<8x8xf32>
    %cst_58 = arith.constant dense<0xFF800000> : vector<8xf32>
    %82 = vector.multi_reduction <maximumf>, %81, %cst_58 [1] : vector<8x8xf32> to vector<8xf32>
    %83 = vector.shape_cast %82 : vector<8xf32> to vector<8x1xf32>
    %84 = vector.broadcast %83 : vector<8x1xf32> to vector<8x8xf32>
    %85 = arith.subf %81, %84 : vector<8x8xf32>
    %86 = math.exp %85 : vector<8x8xf32>
    %cst_59 = arith.constant dense<0.000000e+00> : vector<8xf32>
    %87 = vector.multi_reduction <add>, %86, %cst_59 [1] : vector<8x8xf32> to vector<8xf32>
    %88 = vector.shape_cast %87 : vector<8xf32> to vector<8x1xf32>
    %89 = tpu.reciprocal %88 {approx = true} : vector<8x1xf32> -> vector<8x1xf32>
    %90 = arith.mulf %88, %89 : vector<8x1xf32>
    %cst_60 = arith.constant 2.000000e+00 : f32
    %91 = vector.broadcast %cst_60 : f32 to vector<8x1xf32>
    %92 = arith.subf %91, %90 : vector<8x1xf32>
    %93 = arith.mulf %89, %92 : vector<8x1xf32>
    %94 = vector.broadcast %93 : vector<8x1xf32> to vector<8x8xf32>
    %95 = arith.mulf %86, %94 : vector<8x8xf32>
    %cst_61 = arith.constant dense<0.000000e+00> : vector<8x8xf32>
    %96 = tpu.matmul %95, %80, %cst_61 {dimension_numbers = #tpu.dot_dimension_numbers<[1], [0], [0], [1], [0, 0, 1, 1], [], []>} : vector<8x8xf32>, vector<8x8xf32>, vector<8x8xf32> -> vector<8x8xf32>
    %c0_62 = arith.constant 0 : index
    %c24_63 = arith.constant 24 : index
    %97 = vector.load %arg12[%c0_62, %c24_63] : memref<8x32xf32, #tpu.memory_space<vmem>>, vector<8x8xf32>
    tpu.vector_store %arg12[%c0_62, %c24_63], %96 {strides = array<i32>} : memref<8x32xf32, #tpu.memory_space<vmem>>, vector<8x8xf32>,
    %c0_64 = arith.constant 0 : index
    %c0_65 = arith.constant 0 : index
    %98 = vector.load %arg12[%c0_64, %c0_65] : memref<8x32xf32, #tpu.memory_space<vmem>>, vector<8x32xf32>
    %c0_66 = arith.constant 0 : index
    %c0_67 = arith.constant 0 : index
    %99 = vector.load %arg7[%c0_66, %c0_67] : memref<32x32xf32, #tpu.memory_space<vmem>>, vector<32x32xf32>
    %cst_68 = arith.constant dense<0.000000e+00> : vector<8x32xf32>
    %100 = tpu.matmul %98, %99, %cst_68 {dimension_numbers = #tpu.dot_dimension_numbers<[1], [0], [0], [1], [0, 0, 1, 1], [], []>} : vector<8x32xf32>, vector<32x32xf32>, vector<8x32xf32> -> vector<8x32xf32>
    %c0_69 = arith.constant 0 : index
    %c0_70 = arith.constant 0 : index
    %101 = vector.load %arg8[%c0_69, %c0_70] : memref<1x32xf32, #tpu.memory_space<vmem>>, vector<1x32xf32>
    %102 = vector.broadcast %101 : vector<1x32xf32> to vector<8x32xf32>
    %103 = arith.addf %100, %102 : vector<8x32xf32>
    %c0_71 = arith.constant 0 : index
    %c0_72 = arith.constant 0 : index
    %c0_73 = arith.constant 0 : index
    %104 = vector.load %arg9[%c0_71, %c0_72, %c0_73] : memref<1x8x32xf32, #tpu.memory_space<vmem>>, vector<1x8x32xf32>
    %105 = vector.shape_cast %104 : vector<1x8x32xf32> to vector<8x32xf32>
    %106 = vector.shape_cast %103 : vector<8x32xf32> to vector<1x8x32xf32>
    tpu.vector_store %arg9[%c0_71, %c0_72, %c0_73], %106 {strides = array<i32>} : memref<1x8x32xf32, #tpu.memory_space<vmem>>, vector<1x8x32xf32>,
    return
  }
  func.func @transform_0(%arg0: i32) -> (i32, i32, i32) {
    %c0_i32 = arith.constant 0 : i32
    %c0_i32_0 = arith.constant 0 : i32
    %c0_i32_1 = arith.constant 0 : i32
    return %arg0, %c0_i32, %c0_i32_0 : i32, i32, i32
  }
  func.func @transform_1(%arg0: i32) -> (i32, i32, i32) {
    %c0_i32 = arith.constant 0 : i32
    %c0_i32_0 = arith.constant 0 : i32
    %c0_i32_1 = arith.constant 0 : i32
    return %arg0, %c0_i32, %c0_i32_0 : i32, i32, i32
  }
  func.func @transform_2(%arg0: i32) -> (i32, i32) {
    %c0_i32 = arith.constant 0 : i32
    %c0_i32_0 = arith.constant 0 : i32
    %c0_i32_1 = arith.constant 0 : i32
    return %c0_i32, %c0_i32_0 : i32, i32
  }
  func.func @transform_3(%arg0: i32) -> (i32, i32) {
    %c0_i32 = arith.constant 0 : i32
    %c0_i32_0 = arith.constant 0 : i32
    %c0_i32_1 = arith.constant 0 : i32
    return %c0_i32, %c0_i32_0 : i32, i32
  }
  func.func @transform_4(%arg0: i32) -> (i32, i32) {
    %c0_i32 = arith.constant 0 : i32
    %c0_i32_0 = arith.constant 0 : i32
    %c0_i32_1 = arith.constant 0 : i32
    return %c0_i32, %c0_i32_0 : i32, i32
  }
  func.func @transform_5(%arg0: i32) -> (i32, i32) {
    %c0_i32 = arith.constant 0 : i32
    %c0_i32_0 = arith.constant 0 : i32
    %c0_i32_1 = arith.constant 0 : i32
    return %c0_i32, %c0_i32_0 : i32, i32
  }
  func.func @transform_6(%arg0: i32) -> (i32, i32) {
    %c0_i32 = arith.constant 0 : i32
    %c0_i32_0 = arith.constant 0 : i32
    %c0_i32_1 = arith.constant 0 : i32
    return %c0_i32, %c0_i32_0 : i32, i32
  }
  func.func @transform_7(%arg0: i32) -> (i32, i32) {
    %c0_i32 = arith.constant 0 : i32
    %c0_i32_0 = arith.constant 0 : i32
    %c0_i32_1 = arith.constant 0 : i32
    return %c0_i32, %c0_i32_0 : i32, i32
  }
  func.func @transform_8(%arg0: i32) -> (i32, i32, i32) {
    %c0_i32 = arith.constant 0 : i32
    %c0_i32_0 = arith.constant 0 : i32
    %c0_i32_1 = arith.constant 0 : i32
    return %arg0, %c0_i32, %c0_i32_0 : i32, i32, i32
  }
}

</mosaic_0001>

<llo_original>
// kernel: tpu_custom_call.1
$region0: #{tpu_custom_call.1}
  #allocation0 [shape = 'u32[]', space=smem, size = 0x4, offset = 0x4, fixed_abs, tag = 'smem constant byte address 0x4 - core index']
  #allocation1 [shape = 'u32[144,128]{1,0:T(1,128)}', space=vmem, size = 0x12000, scoped, tag = 'internal scratch']
  #allocation2 [shape = 'f32[8,32]{1,0:T(8,128)}', space=vmem, size = 0x1000, scoped, tag = 'scratch operand']
  #allocation3 [shape = 'f32[8,64]{1,0:T(8,128)}', space=vmem, size = 0x1000, scoped, tag = 'scratch operand']
  #allocation4 [shape = 'f32[8,32]{1,0:T(8,128)}', space=vmem, size = 0x1000, scoped, tag = 'scratch operand']
  %s0 = inlined_call_operand.hbm [shape: f32[2,8,32], index: 0, kind: input, shape index: {}]
  %s1 = inlined_call_operand.hbm [shape: f32[2,8,32], index: 1, kind: input, shape index: {}]
  %s2 = inlined_call_operand.hbm [shape: f32[32,32], index: 2, kind: input, shape index: {}]
  %s3 = inlined_call_operand.hbm [shape: f32[32,64], index: 3, kind: input, shape index: {}]
  %s4 = inlined_call_operand.vmem [shape: f32[1,32], index: 4, kind: input, shape index: {}]
  %s5 = inlined_call_operand.vmem [shape: f32[1,64], index: 5, kind: input, shape index: {}]
  %s6 = inlined_call_operand.hbm [shape: f32[32,32], index: 6, kind: input, shape index: {}]
  %s7 = inlined_call_operand.vmem [shape: f32[1,32], index: 7, kind: input, shape index: {}]
  %s8 = inlined_call_operand.hbm [shape: f32[2,8,32], index: 8, kind: output, shape index: {}]
  %s9 = sld [smem:[#allocation0]]
  $region85: #{tpu_custom_call.1} parent=0
    _
  %s11 = ssub.s32 1, %s9
  %s12 = scalar_select 0, %s11, %s9
  $region1: #{tpu_custom_call.1} parent=0
    #allocation5 [shape = 'u8[8192]{0}', space=vmem, size = 0x2000, scoped, tag = 'input window, operand 0']
    #allocation6 [shape = 's32[2]{0}', space=sflag, size = 0x8, scoped, tag = 'scoped memory for tpu_custom_call.1']
    #allocation7 [shape = 's32[2]{0}', space=sflag, size = 0x8, scoped, tag = 'scoped memory for tpu_custom_call.1']
    #allocation8 [shape = 'u8[8192]{0}', space=vmem, size = 0x2000, scoped, tag = 'input window, operand 1']
    #allocation9 [shape = 's32[2]{0}', space=sflag, size = 0x8, scoped, tag = 'scoped memory for tpu_custom_call.1']
    #allocation10 [shape = 'u8[16384]{0}', space=vmem, size = 0x4000, scoped, tag = 'input window, operand 2, single buffered']
    #allocation11 [shape = 'u8[16384]{0}', space=vmem, size = 0x4000, scoped, tag = 'input window, operand 3, single buffered']
    #allocation12 [shape = 's32[1]{0}', space=sflag, size = 0x4, scoped, tag = 'scoped memory for tpu_custom_call.1']
    #allocation13 [shape = 'u8[16384]{0}', space=vmem, size = 0x4000, scoped, tag = 'input window, operand 6, single buffered']
    #allocation14 [shape = 'u8[8192]{0}', space=vmem, size = 0x2000, scoped, tag = 'output window, operand 0']
    %13 = vsyncpa [#allocation6], 0
    %s14 = scalar_lea.sflag [#allocation6], 1
    %15 = vsyncpa %s14, 0
    %16 = vsyncpa [#allocation9], 0
    %s17 = scalar_lea.sflag [#allocation9], 1
    %18 = vsyncpa %s17, 0
    %19 = vsyncpa [#allocation12], 0
    %20 = vsyncpa [#allocation7], 0
    %s21 = scalar_lea.sflag [#allocation7], 1
    %22 = vsyncpa %s21, 0
    loop: start=0, step=1, limit=4
    $region2: #{tpu_custom_call.1} parent=1 // loop_pre_header
      _
    $region3: #{tpu_custom_call.1} parent=1 // loop_header
      %s24 = sphi 0, %s28
      %p25 = scmp.ge.s32.totalorder %s24, 4
      %s34 = sphi 0, %s36
      %s37 = sphi 0, %s34
      %s38 = sphi 0, %s37
      %s54 = sphi 0, %s38
      %s60 = sphi 0, %s62
      %s63 = sphi 0, %s60
      %s64 = sphi 0, %s63
      %s80 = sphi 0, %s64
      %s84 = sphi 0, %s84
      %s86 = sphi 0, %s84
      %s87 = sphi 0, %s86
      %s101 = sphi 0, %s87
      %s105 = sphi 0, %s105
      %s107 = sphi 0, %s105
      %s108 = sphi 0, %s107
      %s122 = sphi 0, %s108
      %s126 = sphi 0, %s126
      %s128 = sphi 0, %s126
      %s129 = sphi 0, %s128
      %s143 = sphi 0, %s129
      %s147 = sphi 0, %s147
      %s149 = sphi 0, %s147
      %s150 = sphi 0, %s149
      %s164 = sphi 0, %s150
      %s168 = sphi 0, %s168
      %s170 = sphi 0, %s168
      %s171 = sphi 0, %s170
      %s185 = sphi 0, %s171
      %s189 = sphi 0, %s189
      %s191 = sphi 0, %s189
      %s192 = sphi 0, %s191
      %s206 = sphi 0, %s192
      %s212 = sphi 0, %s214
      %s215 = sphi 0, %s212
      %s216 = sphi 0, %s215
      %s232 = sphi 0, %s216
    $region4: #{tpu_custom_call.1} parent=1 // loop_header_branch
      %27 = sbr.rel (%p25) target = $region8
    $region5: #{tpu_custom_call.1} parent=1 // loop_body
      %s29 = ssub.s32 %s24, 1
      %s30 = ssub.s32 %s24, 2
      %s31 = sadd.s32 %s24, 1
      %s32 = ssub.s32 %s24, %s31
      %p33 = scmp.eq.s32.totalorder %s32, 0
      %s35 = sadd.s32 %s34, 1
      %s36 = scalar_select %p33, %s34, %s35
      %p39 = pneg %p33
      %p40 = scmp.eq.s32.totalorder %s24, 1
      %p41 = por %p39, %p40
      %p42 = scmp.ne.s32.totalorder %s34, %s37
      %p43 = scmp.eq.s32.totalorder %s24, 0
      %p44 = por %p42, %p43
      %p45 = scmp.ne.s32.totalorder %s34, %s37
      %p46 = scmp.eq.s32.totalorder %s29, 1
      %p47 = por %p45, %p46
      %p48 = scmp.ne.s32.totalorder %s37, %s38
      %p49 = scmp.eq.s32.totalorder %s29, 0
      %p50 = por %p48, %p49
      %p51 = scmp.ne.s32.totalorder %s37, %s38
      %p52 = scmp.eq.s32.totalorder %s30, 1
      %p53 = por %p51, %p52
      %p55 = scmp.ne.s32.totalorder %s38, %s54
      %p56 = scmp.eq.s32.totalorder %s30, 0
      %p57 = por %p55, %p56
      %s58 = ssub.s32 %s24, %s31
      %p59 = scmp.eq.s32.totalorder %s58, 0
      %s61 = sadd.s32 %s60, 1
      %s62 = scalar_select %p59, %s60, %s61
      %p65 = pneg %p59
      %p66 = scmp.eq.s32.totalorder %s24, 1
      %p67 = por %p65, %p66
      %p68 = scmp.ne.s32.totalorder %s60, %s63
      %p69 = scmp.eq.s32.totalorder %s24, 0
      %p70 = por %p68, %p69
      %p71 = scmp.ne.s32.totalorder %s60, %s63
      %p72 = scmp.eq.s32.totalorder %s29, 1
      %p73 = por %p71, %p72
      %p74 = scmp.ne.s32.totalorder %s63, %s64
      %p75 = scmp.eq.s32.totalorder %s29, 0
      %p76 = por %p74, %p75
      %p77 = scmp.ne.s32.totalorder %s63, %s64
      %p78 = scmp.eq.s32.totalorder %s30, 1
      %p79 = por %p77, %p78
      %p81 = scmp.ne.s32.totalorder %s64, %s80
      %p82 = scmp.eq.s32.totalorder %s30, 0
      %p83 = por %p81, %p82
      %s85 = sadd.s32 %s84, 1
      %p88 = scmp.eq.s32.totalorder %s24, 1
      %p89 = scmp.ne.s32.totalorder %s84, %s86
      %p90 = scmp.eq.s32.totalorder %s24, 0
      %p91 = por %p89, %p90
      %p92 = scmp.ne.s32.totalorder %s84, %s86
      %p93 = scmp.eq.s32.totalorder %s29, 1
      %p94 = por %p92, %p93
      %p95 = scmp.ne.s32.totalorder %s86, %s87
      %p96 = scmp.eq.s32.totalorder %s29, 0
      %p97 = por %p95, %p96
      %p98 = scmp.ne.s32.totalorder %s86, %s87
      %p99 = scmp.eq.s32.totalorder %s30, 1
      %p100 = por %p98, %p99
      %p102 = scmp.ne.s32.totalorder %s87, %s101
      %p103 = scmp.eq.s32.totalorder %s30, 0
      %p104 = por %p102, %p103
      %s106 = sadd.s32 %s105, 1
      %p109 = scmp.eq.s32.totalorder %s24, 1
      %p110 = scmp.ne.s32.totalorder %s105, %s107
      %p111 = scmp.eq.s32.totalorder %s24, 0
      %p112 = por %p110, %p111
      %p113 = scmp.ne.s32.totalorder %s105, %s107
      %p114 = scmp.eq.s32.totalorder %s29, 1
      %p115 = por %p113, %p114
      %p116 = scmp.ne.s32.totalorder %s107, %s108
      %p117 = scmp.eq.s32.totalorder %s29, 0
      %p118 = por %p116, %p117
      %p119 = scmp.ne.s32.totalorder %s107, %s108
      %p120 = scmp.eq.s32.totalorder %s30, 1
      %p121 = por %p119, %p120
      %p123 = scmp.ne.s32.totalorder %s108, %s122
      %p124 = scmp.eq.s32.totalorder %s30, 0
      %p125 = por %p123, %p124
      %s127 = sadd.s32 %s126, 1
      %p130 = scmp.eq.s32.totalorder %s24, 1
      %p131 = scmp.ne.s32.totalorder %s126, %s128
      %p132 = scmp.eq.s32.totalorder %s24, 0
      %p133 = por %p131, %p132
      %p134 = scmp.ne.s32.totalorder %s126, %s128
      %p135 = scmp.eq.s32.totalorder %s29, 1
      %p136 = por %p134, %p135
      %p137 = scmp.ne.s32.totalorder %s128, %s129
      %p138 = scmp.eq.s32.totalorder %s29, 0
      %p139 = por %p137, %p138
      %p140 = scmp.ne.s32.totalorder %s128, %s129
      %p141 = scmp.eq.s32.totalorder %s30, 1
      %p142 = por %p140, %p141
      %p144 = scmp.ne.s32.totalorder %s129, %s143
      %p145 = scmp.eq.s32.totalorder %s30, 0
      %p146 = por %p144, %p145
      %s148 = sadd.s32 %s147, 1
      %p151 = scmp.eq.s32.totalorder %s24, 1
      %p152 = scmp.ne.s32.totalorder %s147, %s149
      %p153 = scmp.eq.s32.totalorder %s24, 0
      %p154 = por %p152, %p153
      %p155 = scmp.ne.s32.totalorder %s147, %s149
      %p156 = scmp.eq.s32.totalorder %s29, 1
      %p157 = por %p155, %p156
      %p158 = scmp.ne.s32.totalorder %s149, %s150
      %p159 = scmp.eq.s32.totalorder %s29, 0
      %p160 = por %p158, %p159
      %p161 = scmp.ne.s32.totalorder %s149, %s150
      %p162 = scmp.eq.s32.totalorder %s30, 1
      %p163 = por %p161, %p162
      %p165 = scmp.ne.s32.totalorder %s150, %s164
      %p166 = scmp.eq.s32.totalorder %s30, 0
      %p167 = por %p165, %p166
      %s169 = sadd.s32 %s168, 1
      %p172 = scmp.eq.s32.totalorder %s24, 1
      %p173 = scmp.ne.s32.totalorder %s168, %s170
      %p174 = scmp.eq.s32.totalorder %s24, 0
      %p175 = por %p173, %p174
      %p176 = scmp.ne.s32.totalorder %s168, %s170
      %p177 = scmp.eq.s32.totalorder %s29, 1
      %p178 = por %p176, %p177
      %p179 = scmp.ne.s32.totalorder %s170, %s171
      %p180 = scmp.eq.s32.totalorder %s29, 0
      %p181 = por %p179, %p180
      %p182 = scmp.ne.s32.totalorder %s170, %s171
      %p183 = scmp.eq.s32.totalorder %s30, 1
      %p184 = por %p182, %p183
      %p186 = scmp.ne.s32.totalorder %s171, %s185
      %p187 = scmp.eq.s32.totalorder %s30, 0
      %p188 = por %p186, %p187
      %s190 = sadd.s32 %s189, 1
      %p193 = scmp.eq.s32.totalorder %s24, 1
      %p194 = scmp.ne.s32.totalorder %s189, %s191
      %p195 = scmp.eq.s32.totalorder %s24, 0
      %p196 = por %p194, %p195
      %p197 = scmp.ne.s32.totalorder %s189, %s191
      %p198 = scmp.eq.s32.totalorder %s29, 1
      %p199 = por %p197, %p198
      %p200 = scmp.ne.s32.totalorder %s191, %s192
      %p201 = scmp.eq.s32.totalorder %s29, 0
      %p202 = por %p200, %p201
      %p203 = scmp.ne.s32.totalorder %s191, %s192
      %p204 = scmp.eq.s32.totalorder %s30, 1
      %p205 = por %p203, %p204
      %p207 = scmp.ne.s32.totalorder %s192, %s206
      %p208 = scmp.eq.s32.totalorder %s30, 0
      %p209 = por %p207, %p208
      %s210 = ssub.s32 %s24, %s31
      %p211 = scmp.eq.s32.totalorder %s210, 0
      %s213 = sadd.s32 %s212, 1
      %s214 = scalar_select %p211, %s212, %s213
      %p217 = pneg %p211
      %p218 = scmp.eq.s32.totalorder %s24, 1
      %p219 = por %p217, %p218
      %p220 = scmp.ne.s32.totalorder %s212, %s215
      %p221 = scmp.eq.s32.totalorder %s24, 0
      %p222 = por %p220, %p221
      %p223 = scmp.ne.s32.totalorder %s212, %s215
      %p224 = scmp.eq.s32.totalorder %s29, 1
      %p225 = por %p223, %p224
      %p226 = scmp.ne.s32.totalorder %s215, %s216
      %p227 = scmp.eq.s32.totalorder %s29, 0
      %p228 = por %p226, %p227
      %p229 = scmp.ne.s32.totalorder %s215, %s216
      %p230 = scmp.eq.s32.totalorder %s30, 1
      %p231 = por %p229, %p230
      %p233 = scmp.ne.s32.totalorder %s216, %s232
      %p234 = scmp.eq.s32.totalorder %s30, 0
      %p235 = por %p233, %p234
      %p236 = scmp.le.s32.totalorder 1, %s24
      %p237 = scmp.lt.s32.totalorder %s24, 3
      %p238 = pnand %p236, %p237
      %p239 = pneg %p238
      // Predicated region
      $region9: #{tpu_custom_call.1} parent=5 // pred_check
        _
      $region10: #{tpu_custom_call.1} parent=5 // pred_check_branch
        %241 = sbr.rel (%p238) target = $region12
      $region11: #{tpu_custom_call.1} parent=5 // pred_region
        %s242 = ssub.s32 %s24, 1
        // Predicated region
        $region13: #{tpu_custom_call.1} parent=11 // pred_check
          %p243 = pneg %p97
        $region14: #{tpu_custom_call.1} parent=11 // pred_check_branch
          %245 = sbr.rel (%p243) target = $region16
        $region15: #{tpu_custom_call.1} parent=11 // pred_region
          %s247 = ssub.s32 512, 512
          %248 = vsyncadd [#allocation9], %s247
          %s249 = sshll.u32 [#allocation10], 4
          %s250 = int_to_ptr.vmem [resolvable:$true] %s249
          %255 = dma.hbm_to_vmem [thread:$0]  %s2, 512, %s250, [#allocation9], 128, 128, 8
        $region16: #{tpu_custom_call.1} parent=11 // pred_fallthru
          _
        // Predicated region
        $region17: #{tpu_custom_call.1} parent=11 // pred_check
          %p256 = pneg %p118
        $region18: #{tpu_custom_call.1} parent=11 // pred_check_branch
          %258 = sbr.rel (%p256) target = $region20
        $region19: #{tpu_custom_call.1} parent=11 // pred_region
          %s260 = ssub.s32 512, 512
          %261 = vsyncadd [#allocation12], %s260
          %s262 = sshll.u32 [#allocation11], 4
          %s263 = int_to_ptr.vmem [resolvable:$true] %s262
          %268 = dma.hbm_to_vmem [thread:$0]  %s3, 512, %s263, [#allocation12], 128, 128, 8
        $region20: #{tpu_custom_call.1} parent=11 // pred_fallthru
          _
        // Predicated region
        $region21: #{tpu_custom_call.1} parent=11 // pred_check
          %p269 = pneg %p139
        $region22: #{tpu_custom_call.1} parent=11 // pred_check_branch
          %271 = sbr.rel (%p269) target = $region24
        $region23: #{tpu_custom_call.1} parent=11 // pred_region
          _
        $region24: #{tpu_custom_call.1} parent=11 // pred_fallthru
          _
        // Predicated region
        $region25: #{tpu_custom_call.1} parent=11 // pred_check
          %p272 = pneg %p160
        $region26: #{tpu_custom_call.1} parent=11 // pred_check_branch
          %274 = sbr.rel (%p272) target = $region28
        $region27: #{tpu_custom_call.1} parent=11 // pred_region
          _
        $region28: #{tpu_custom_call.1} parent=11 // pred_fallthru
          _
        // Predicated region
        $region29: #{tpu_custom_call.1} parent=11 // pred_check
          %p275 = pneg %p181
        $region30: #{tpu_custom_call.1} parent=11 // pred_check_branch
          %277 = sbr.rel (%p275) target = $region32
        $region31: #{tpu_custom_call.1} parent=11 // pred_region
          %s279 = ssub.s32 512, 512
          %280 = vsyncadd [#allocation12], %s279
          %s281 = sshll.u32 [#allocation13], 4
          %s282 = int_to_ptr.vmem [resolvable:$true] %s281
          %287 = dma.hbm_to_vmem [thread:$0]  %s6, 512, %s282, [#allocation12], 128, 128, 8
        $region32: #{tpu_custom_call.1} parent=11 // pred_fallthru
          _
        // Predicated region
        $region33: #{tpu_custom_call.1} parent=11 // pred_check
          %p288 = pneg %p202
        $region34: #{tpu_custom_call.1} parent=11 // pred_check_branch
          %290 = sbr.rel (%p288) target = $region36
        $region35: #{tpu_custom_call.1} parent=11 // pred_region
          _
        $region36: #{tpu_custom_call.1} parent=11 // pred_fallthru
          _
      $region12: #{tpu_custom_call.1} parent=5 // pred_fallthru
        _
      %p291 = scmp.lt.s32.totalorder %s24, 2
      // Predicated region
      $region37: #{tpu_custom_call.1} parent=5 // pred_check
        %p292 = pneg %p291
      $region38: #{tpu_custom_call.1} parent=5 // pred_check_branch
        %294 = sbr.rel (%p292) target = $region40
      $region39: #{tpu_custom_call.1} parent=5 // pred_region
        // Predicated region
        $region41: #{tpu_custom_call.1} parent=39 // pred_check
          %p295 = pneg %p44
        $region42: #{tpu_custom_call.1} parent=39 // pred_check_branch
          %297 = sbr.rel (%p295) target = $region44
        $region43: #{tpu_custom_call.1} parent=39 // pred_region
          %s298 = sand.u32 %s34, 1
          %s299 = scalar_lea.sflag [#allocation6], %s298
          %s300 = sand.u32 %s34, 1
          %s301 = smul.addr %s300, 8
          %s302 = scalar_lea.vmem [#allocation5], %s301
          %s304 = ssub.s32 128, 128
          %305 = vsyncadd %s299, %s304
          %s306 = smul.addr %s24, 128
          %s307 = scalar_lea.hbm %s0, %s306
          %s309 = sshll.u32 %s302, 4
          %s310 = int_to_ptr.vmem [resolvable:$true] %s309
          %312 = dma.hbm_to_vmem [thread:$0]  %s307, 128, %s310, %s299
        $region44: #{tpu_custom_call.1} parent=39 // pred_fallthru
          _
        // Predicated region
        $region45: #{tpu_custom_call.1} parent=39 // pred_check
          %p313 = pneg %p70
        $region46: #{tpu_custom_call.1} parent=39 // pred_check_branch
          %315 = sbr.rel (%p313) target = $region48
        $region47: #{tpu_custom_call.1} parent=39 // pred_region
          %s316 = sand.u32 %s24, 1
          %s317 = scalar_lea.sflag [#allocation9], %s316
          %s318 = sand.u32 %s60, 1
          %s319 = smul.addr %s318, 8
          %s320 = scalar_lea.vmem [#allocation8], %s319
          %s322 = ssub.s32 128, 128
          %323 = vsyncadd %s317, %s322
          %s324 = smul.addr %s24, 128
          %s325 = scalar_lea.hbm %s1, %s324
          %s327 = sshll.u32 %s320, 4
          %s328 = int_to_ptr.vmem [resolvable:$true] %s327
          %330 = dma.hbm_to_vmem [thread:$0]  %s325, 128, %s328, %s317
        $region48: #{tpu_custom_call.1} parent=39 // pred_fallthru
          _
      $region40: #{tpu_custom_call.1} parent=5 // pred_fallthru
        _
      %p331 = scmp.le.s32.totalorder 1, %s24
      %p332 = scmp.lt.s32.totalorder %s24, 3
      %p333 = pnand %p331, %p332
      %p334 = pneg %p333
      // Predicated region
      $region49: #{tpu_custom_call.1} parent=5 // pred_check
        _
      $region50: #{tpu_custom_call.1} parent=5 // pred_check_branch
        %336 = sbr.rel (%p333) target = $region52
      $region51: #{tpu_custom_call.1} parent=5 // pred_region
        %s337 = ssub.s32 %s24, 1
        %s338 = sand.u32 %s37, 1
        %s339 = scalar_lea.sflag [#allocation6], %s338
        %s340 = sand.u32 %s37, 1
        %s341 = smul.addr %s340, 8
        %s342 = scalar_lea.vmem [#allocation5], %s341
        // Predicated region
        $region53: #{tpu_custom_call.1} parent=51 // pred_check
          %p343 = pneg %p50
        $region54: #{tpu_custom_call.1} parent=51 // pred_check_branch
          %345 = sbr.rel (%p343) target = $region56
        $region55: #{tpu_custom_call.1} parent=51 // pred_region
          %346 = dma.done %s339, 128
        $region56: #{tpu_custom_call.1} parent=51 // pred_fallthru
          _
        %s347 = sand.u32 %s29, 1
        %s348 = scalar_lea.sflag [#allocation9], %s347
        %s349 = sand.u32 %s63, 1
        %s350 = smul.addr %s349, 8
        %s351 = scalar_lea.vmem [#allocation8], %s350
        // Predicated region
        $region57: #{tpu_custom_call.1} parent=51 // pred_check
          %p352 = pneg %p76
        $region58: #{tpu_custom_call.1} parent=51 // pred_check_branch
          %354 = sbr.rel (%p352) target = $region60
        $region59: #{tpu_custom_call.1} parent=51 // pred_region
          %355 = dma.done %s348, 128
        $region60: #{tpu_custom_call.1} parent=51 // pred_fallthru
          _
        // Predicated region
        $region61: #{tpu_custom_call.1} parent=51 // pred_check
          %p356 = pneg %p97
        $region62: #{tpu_custom_call.1} parent=51 // pred_check_branch
          %358 = sbr.rel (%p356) target = $region64
        $region63: #{tpu_custom_call.1} parent=51 // pred_region
          %359 = dma.done [#allocation9], 512
        $region64: #{tpu_custom_call.1} parent=51 // pred_fallthru
          _
        // Predicated region
        $region65: #{tpu_custom_call.1} parent=51 // pred_check
          %p360 = pneg %p118
        $region66: #{tpu_custom_call.1} parent=51 // pred_check_branch
          %362 = sbr.rel (%p360) target = $region68
        $region67: #{tpu_custom_call.1} parent=51 // pred_region
          %363 = dma.done [#allocation12], 512
        $region68: #{tpu_custom_call.1} parent=51 // pred_fallthru
          _
        // Predicated region
        $region69: #{tpu_custom_call.1} parent=51 // pred_check
          %p364 = pneg %p181
        $region70: #{tpu_custom_call.1} parent=51 // pred_check_branch
          %366 = sbr.rel (%p364) target = $region72
        $region71: #{tpu_custom_call.1} parent=51 // pred_region
          %367 = dma.done [#allocation12], 512
        $region72: #{tpu_custom_call.1} parent=51 // pred_fallthru
          _
        %s368 = sand.u32 %s37, 1
        %s369 = scalar_lea.sflag [#allocation6], %s368
        %s370 = sand.u32 %s37, 1
        %s371 = smul.addr %s370, 8
        %s372 = scalar_lea.vmem [#allocation5], %s371
        %p373 = pneg %p50
        %p374 = pneg %p47
        %s375 = sand.u32 %s29, 1
        %s376 = scalar_lea.sflag [#allocation9], %s375
        %s377 = sand.u32 %s63, 1
        %s378 = smul.addr %s377, 8
        %s379 = scalar_lea.vmem [#allocation8], %s378
        %p380 = pneg %p76
        %p381 = pneg %p73
        %p382 = pneg %p97
        %p383 = pneg %p94
        %p384 = pneg %p118
        %p385 = pneg %p115
        %p386 = pneg %p139
        %p387 = pneg %p136
        %p388 = pneg %p160
        %p389 = pneg %p157
        %p390 = pneg %p181
        %p391 = pneg %p178
        %p392 = pneg %p202
        %p393 = pneg %p199
        %p394 = pneg %p228
        %p395 = pneg %p225
        %s396 = sand.u32 %s215, 1
        %s397 = scalar_lea.sflag [#allocation7], %s396
        %s398 = sand.u32 %s215, 1
        %s399 = smul.addr %s398, 8
        %s400 = scalar_lea.vmem [#allocation14], %s399
        %v401 = vld [vmem:[%s342] sm:$0xff]
        %v402 = vld [vmem:[%s351] sm:$0xff]
        %v403 = vld [vmem:[#allocation10] sm:$0xff]
        %v404 = vld [vmem:[#allocation10 + $0x8] sm:$0xff]
        %v405 = vld [vmem:[#allocation10 + $0x10] sm:$0xff]
        %v406 = vld [vmem:[#allocation10 + $0x18] sm:$0xff]
        %v407 = vld [vmem:[%s4] sm:$0x1]
        %v409 = vlaneseq
        %v410 = vshrl.u32 %v409, 7
        %v411 = vsub.s32 0, %v410
        %v412 = vrot.slane %v407, %v411
        %vm414 = vcmask 261120
        %v416 = vsel %vm414, %v401, 0
        %418 = vmatprep.subr.mxu0 0.0
        %419 = vmatpush1.msra.mxu0 %v403
        %420 = vmatprep.subr.mxu0 0.0
        %421 = vmatpush1.msra.mxu0 %v404
        %422 = vmatprep.subr.mxu0 0.0
        %423 = vmatpush1.msra.mxu0 %v405
        %424 = vmatprep.subr.mxu0 0.0
        %425 = vmatpush1.msra.mxu0 %v406
        %426 = vmatprep.subr.mxu0 0.0
        %427 = vmatpush1.msra.mxu0 0.0
        %428 = vmatprep.subr.mxu0 0.0
        %429 = vmatpush1.msra.mxu0 0.0
        %430 = vmatprep.subr.mxu0 0.0
        %431 = vmatpush1.msra.mxu0 0.0
        %432 = vmatprep.subr.mxu0 0.0
        %433 = vmatpush1.msra.mxu0 0.0
        %434 = vmatprep.subr.mxu0 0.0
        %435 = vmatpush1.msra.mxu0 0.0
        %436 = vmatprep.subr.mxu0 0.0
        %437 = vmatpush1.msra.mxu0 0.0
        %438 = vmatprep.subr.mxu0 0.0
        %439 = vmatpush1.msra.mxu0 0.0
        %440 = vmatprep.subr.mxu0 0.0
        %441 = vmatpush1.msra.mxu0 0.0
        %442 = vmatprep.subr.mxu0 0.0
        %443 = vmatpush1.msra.mxu0 0.0
        %444 = vmatprep.subr.mxu0 0.0
        %445 = vmatpush1.msra.mxu0 0.0
        %446 = vmatprep.subr.mxu0 0.0
        %447 = vmatpush1.msra.mxu0 0.0
        %448 = vmatprep.subr.mxu0 0.0
        %449 = vmatpush1.msra.mxu0 0.0
        %450 = vmatprep.subr.mxu0 0.0
        %451 = vmatpush1.msra.mxu0 0.0
        %452 = vmatprep.subr.mxu0 0.0
        %453 = vmatpush1.msra.mxu0 0.0
        %454 = vmatprep.subr.mxu0 0.0
        %455 = vmatpush1.msra.mxu0 0.0
        %456 = vmatprep.subr.mxu0 0.0
        %457 = vmatpush1.msra.mxu0 0.0
        %458 = vmatprep.subr.mxu0 0.0
        %459 = vmatpush1.msra.mxu0 0.0
        %460 = vmatprep.subr.mxu0 0.0
        %461 = vmatpush1.msra.mxu0 0.0
        %462 = vmatprep.subr.mxu0 0.0
        %463 = vmatpush1.msra.mxu0 0.0
        %464 = vmatprep.subr.mxu0 0.0
        %465 = vmatpush1.msra.mxu0 0.0
        %466 = vmatprep.subr.mxu0 0.0
        %467 = vmatpush1.msra.mxu0 0.0
        %468 = vmatprep.subr.mxu0 0.0
        %469 = vmatpush1.msra.mxu0 0.0
        %470 = vmatprep.subr.mxu0 0.0
        %471 = vmatpush1.msra.mxu0 0.0
        %472 = vmatprep.subr.mxu0 0.0
        %473 = vmatpush1.msra.mxu0 0.0
        %474 = vmatprep.subr.mxu0 0.0
        %475 = vmatpush1.msra.mxu0 0.0
        %476 = vmatprep.subr.mxu0 0.0
        %477 = vmatpush1.msra.mxu0 0.0
        %478 = vmatprep.subr.mxu0 0.0
        %479 = vmatpush1.msra.mxu0 0.0
        %480 = vmatprep.subr.mxu0 0.0
        %481 = vmatpush1.msra.mxu0 0.0
        %482 = vmatprep.mubr.f32.mxu0 0.0
        %483 = vmatmul.mubr.f32.gmra.mrb[0].mxu0 %v416
        %v484 = vpop.f32.mrb[0].mxu0
        %v485 = vadd.f32 %v412, %v484
        %v486 = vpop.f32.mrb[0].mxu0
        %487 = vdwg.mxu0
        %v488 = vmul.f32 %v485, 0.35355338
        %489 = vst.msk [vmem:[#allocation2] sm:$0xff] %vm414, %v488
        %v490 = vld [vmem:[#allocation11] sm:$0xff]
        %v491 = vld [vmem:[#allocation11 + $0x8] sm:$0xff]
        %v492 = vld [vmem:[#allocation11 + $0x10] sm:$0xff]
        %v493 = vld [vmem:[#allocation11 + $0x18] sm:$0xff]
        %v494 = vld [vmem:[%s5] sm:$0x1]
        %v496 = vlaneseq
        %v497 = vshrl.u32 %v496, 7
        %v498 = vsub.s32 0, %v497
        %v499 = vrot.slane %v494, %v498
        %v502 = vsel %vm414, %v402, 0
        %504 = vmatprep.subr.mxu0 0.0
        %505 = vmatpush1.msra.mxu0 %v490
        %506 = vmatprep.subr.mxu0 0.0
        %507 = vmatpush1.msra.mxu0 %v491
        %508 = vmatprep.subr.mxu0 0.0
        %509 = vmatpush1.msra.mxu0 %v492
        %510 = vmatprep.subr.mxu0 0.0
        %511 = vmatpush1.msra.mxu0 %v493
        %512 = vmatprep.subr.mxu0 0.0
        %513 = vmatpush1.msra.mxu0 0.0
        %514 = vmatprep.subr.mxu0 0.0
        %515 = vmatpush1.msra.mxu0 0.0
        %516 = vmatprep.subr.mxu0 0.0
        %517 = vmatpush1.msra.mxu0 0.0
        %518 = vmatprep.subr.mxu0 0.0
        %519 = vmatpush1.msra.mxu0 0.0
        %520 = vmatprep.subr.mxu0 0.0
        %521 = vmatpush1.msra.mxu0 0.0
        %522 = vmatprep.subr.mxu0 0.0
        %523 = vmatpush1.msra.mxu0 0.0
        %524 = vmatprep.subr.mxu0 0.0
        %525 = vmatpush1.msra.mxu0 0.0
        %526 = vmatprep.subr.mxu0 0.0
        %527 = vmatpush1.msra.mxu0 0.0
        %528 = vmatprep.subr.mxu0 0.0
        %529 = vmatpush1.msra.mxu0 0.0
        %530 = vmatprep.subr.mxu0 0.0
        %531 = vmatpush1.msra.mxu0 0.0
        %532 = vmatprep.subr.mxu0 0.0
        %533 = vmatpush1.msra.mxu0 0.0
        %534 = vmatprep.subr.mxu0 0.0
        %535 = vmatpush1.msra.mxu0 0.0
        %536 = vmatprep.subr.mxu0 0.0
        %537 = vmatpush1.msra.mxu0 0.0
        %538 = vmatprep.subr.mxu0 0.0
        %539 = vmatpush1.msra.mxu0 0.0
        %540 = vmatprep.subr.mxu0 0.0
        %541 = vmatpush1.msra.mxu0 0.0
        %542 = vmatprep.subr.mxu0 0.0
        %543 = vmatpush1.msra.mxu0 0.0
        %544 = vmatprep.subr.mxu0 0.0
        %545 = vmatpush1.msra.mxu0 0.0
        %546 = vmatprep.subr.mxu0 0.0
        %547 = vmatpush1.msra.mxu0 0.0
        %548 = vmatprep.subr.mxu0 0.0
        %549 = vmatpush1.msra.mxu0 0.0
        %550 = vmatprep.subr.mxu0 0.0
        %551 = vmatpush1.msra.mxu0 0.0
        %552 = vmatprep.subr.mxu0 0.0
        %553 = vmatpush1.msra.mxu0 0.0
        %554 = vmatprep.subr.mxu0 0.0
        %555 = vmatpush1.msra.mxu0 0.0
        %556 = vmatprep.subr.mxu0 0.0
        %557 = vmatpush1.msra.mxu0 0.0
        %558 = vmatprep.subr.mxu0 0.0
        %559 = vmatpush1.msra.mxu0 0.0
        %560 = vmatprep.subr.mxu0 0.0
        %561 = vmatpush1.msra.mxu0 0.0
        %562 = vmatprep.subr.mxu0 0.0
        %563 = vmatpush1.msra.mxu0 0.0
        %564 = vmatprep.subr.mxu0 0.0
        %565 = vmatpush1.msra.mxu0 0.0
        %566 = vmatprep.subr.mxu0 0.0
        %567 = vmatpush1.msra.mxu0 0.0
        %568 = vmatprep.mubr.f32.mxu0 0.0
        %569 = vmatmul.mubr.f32.gmra.mrb[0].mxu0 %v502
        %v570 = vpop.f32.mrb[0].mxu0
        %v571 = vadd.f32 %v499, %v570
        %v572 = vpop.f32.mrb[0].mxu0
        %573 = vdwg.mxu0
        %vm574 = vcmask 523264
        %575 = vst.msk [vmem:[#allocation3] sm:$0xff] %vm574, %v571
        %v576 = vld [vmem:[#allocation2] sm:$0xff]
        %v577 = vld [vmem:[#allocation3] sm:$0xff]
        %vm578 = vcmask 64512
        %v580 = vsel %vm578, %v576, 0
        %v583 = vsel %vm578, %v577, 0
        %585 = vmatprep.subr.mxu0 0.0
        %586 = vmatpush1.xpose.msra.mxu0 %v583
        %587 = vmatprep.subr.mxu0 0.0
        %588 = vmatpush1.xpose.msra.mxu0 0.0
        %589 = vmatprep.subr.mxu0 0.0
        %590 = vmatpush1.xpose.msra.mxu0 0.0
        %591 = vmatprep.subr.mxu0 0.0
        %592 = vmatpush1.xpose.msra.mxu0 0.0
        %593 = vmatprep.subr.mxu0 0.0
        %594 = vmatpush1.xpose.msra.mxu0 0.0
        %595 = vmatprep.subr.mxu0 0.0
        %596 = vmatpush1.xpose.msra.mxu0 0.0
        %597 = vmatprep.subr.mxu0 0.0
        %598 = vmatpush1.xpose.msra.mxu0 0.0
        %599 = vmatprep.subr.mxu0 0.0
        %600 = vmatpush1.xpose.msra.mxu0 0.0
        %601 = vmatprep.subr.mxu0 0.0
        %602 = vmatpush1.xpose.msra.mxu0 0.0
        %603 = vmatprep.subr.mxu0 0.0
        %604 = vmatpush1.xpose.msra.mxu0 0.0
        %605 = vmatprep.subr.mxu0 0.0
        %606 = vmatpush1.xpose.msra.mxu0 0.0
        %607 = vmatprep.subr.mxu0 0.0
        %608 = vmatpush1.xpose.msra.mxu0 0.0
        %609 = vmatprep.subr.mxu0 0.0
        %610 = vmatpush1.xpose.msra.mxu0 0.0
        %611 = vmatprep.subr.mxu0 0.0
        %612 = vmatpush1.xpose.msra.mxu0 0.0
        %613 = vmatprep.subr.mxu0 0.0
        %614 = vmatpush1.xpose.msra.mxu0 0.0
        %615 = vmatprep.subr.mxu0 0.0
        %616 = vmatpush1.xpose.msra.mxu0 0.0
        %617 = vmatprep.subr.mxu0 0.0
        %618 = vmatpush1.xpose.msra.mxu0 0.0
        %619 = vmatprep.subr.mxu0 0.0
        %620 = vmatpush1.xpose.msra.mxu0 0.0
        %621 = vmatprep.subr.mxu0 0.0
        %622 = vmatpush1.xpose.msra.mxu0 0.0
        %623 = vmatprep.subr.mxu0 0.0
        %624 = vmatpush1.xpose.msra.mxu0 0.0
        %625 = vmatprep.subr.mxu0 0.0
        %626 = vmatpush1.xpose.msra.mxu0 0.0
        %627 = vmatprep.subr.mxu0 0.0
        %628 = vmatpush1.xpose.msra.mxu0 0.0
        %629 = vmatprep.subr.mxu0 0.0
        %630 = vmatpush1.xpose.msra.mxu0 0.0
        %631 = vmatprep.subr.mxu0 0.0
        %632 = vmatpush1.xpose.msra.mxu0 0.0
        %633 = vmatprep.subr.mxu0 0.0
        %634 = vmatpush1.xpose.msra.mxu0 0.0
        %635 = vmatprep.subr.mxu0 0.0
        %636 = vmatpush1.xpose.msra.mxu0 0.0
        %637 = vmatprep.subr.mxu0 0.0
        %638 = vmatpush1.xpose.msra.mxu0 0.0
        %639 = vmatprep.subr.mxu0 0.0
        %640 = vmatpush1.xpose.msra.mxu0 0.0
        %641 = vmatprep.subr.mxu0 0.0
        %642 = vmatpush1.xpose.msra.mxu0 0.0
        %643 = vmatprep.subr.mxu0 0.0
        %644 = vmatpush1.xpose.msra.mxu0 0.0
        %645 = vmatprep.subr.mxu0 0.0
        %646 = vmatpush1.xpose.msra.mxu0 0.0
        %647 = vmatprep.subr.mxu0 0.0
        %648 = vmatpush1.xpose.msra.mxu0 0.0
        %649 = vmatprep.mubr.f32.mxu0 0.0
        %650 = vmatmul.mubr.f32.gmra.mrb[0].mxu0 %v580
        %v651 = vpop.f32.mrb[0].mxu0
        %v652 = vadd.f32 0.0, %v651
        %v653 = vpop.f32.mrb[0].mxu0
        %654 = vdwg.mxu0
        %v655 = vsel %vm578, %v652, -inf
        %656 = vmax.xlane.f32.xlu0 %v655
        %v657 = vpop.xlane.xlu0 %656
        %v658 = vsub.f32 %v652, %v657
        %v659 = vmul.f32 %v658, 1.442695
        %v660 = vpow.pop %v659
        %v661 = vsel %vm578, %v660, 0.0
        %662 = vadd.xlane.f32.xlu0 %v661
        %v663 = vpop.xlane.xlu0 %662
        %v664 = vrcp.pop %v663
        %v665 = vmul.f32 %v663, %v664
        %v666 = vsub.f32 2.0, %v665
        %v667 = vmul.f32 %v664, %v666
        %v668 = vmul.f32 %v660, %v667
        %669 = vrot.lane.b32.xlu0 %v577, 96
        %v670 = vpop.permute.xlu0 %669
        %v673 = vsel %vm578, %v668, 0
        %675 = vmatprep.subr.mxu0 0.0
        %676 = vmatpush1.msra.mxu0 %v670
        %677 = vmatprep.subr.mxu0 0.0
        %678 = vmatpush1.msra.mxu0 0.0
        %679 = vmatprep.subr.mxu0 0.0
        %680 = vmatpush1.msra.mxu0 0.0
        %681 = vmatprep.subr.mxu0 0.0
        %682 = vmatpush1.msra.mxu0 0.0
        %683 = vmatprep.subr.mxu0 0.0
        %684 = vmatpush1.msra.mxu0 0.0
        %685 = vmatprep.subr.mxu0 0.0
        %686 = vmatpush1.msra.mxu0 0.0
        %687 = vmatprep.subr.mxu0 0.0
        %688 = vmatpush1.msra.mxu0 0.0
        %689 = vmatprep.subr.mxu0 0.0
        %690 = vmatpush1.msra.mxu0 0.0
        %691 = vmatprep.subr.mxu0 0.0
        %692 = vmatpush1.msra.mxu0 0.0
        %693 = vmatprep.subr.mxu0 0.0
        %694 = vmatpush1.msra.mxu0 0.0
        %695 = vmatprep.subr.mxu0 0.0
        %696 = vmatpush1.msra.mxu0 0.0
        %697 = vmatprep.subr.mxu0 0.0
        %698 = vmatpush1.msra.mxu0 0.0
        %699 = vmatprep.subr.mxu0 0.0
        %700 = vmatpush1.msra.mxu0 0.0
        %701 = vmatprep.subr.mxu0 0.0
        %702 = vmatpush1.msra.mxu0 0.0
        %703 = vmatprep.subr.mxu0 0.0
        %704 = vmatpush1.msra.mxu0 0.0
        %705 = vmatprep.subr.mxu0 0.0
        %706 = vmatpush1.msra.mxu0 0.0
        %707 = vmatprep.subr.mxu0 0.0
        %708 = vmatpush1.msra.mxu0 0.0
        %709 = vmatprep.subr.mxu0 0.0
        %710 = vmatpush1.msra.mxu0 0.0
        %711 = vmatprep.subr.mxu0 0.0
        %712 = vmatpush1.msra.mxu0 0.0
        %713 = vmatprep.subr.mxu0 0.0
        %714 = vmatpush1.msra.mxu0 0.0
        %715 = vmatprep.subr.mxu0 0.0
        %716 = vmatpush1.msra.mxu0 0.0
        %717 = vmatprep.subr.mxu0 0.0
        %718 = vmatpush1.msra.mxu0 0.0
        %719 = vmatprep.subr.mxu0 0.0
        %720 = vmatpush1.msra.mxu0 0.0
        %721 = vmatprep.subr.mxu0 0.0
        %722 = vmatpush1.msra.mxu0 0.0
        %723 = vmatprep.subr.mxu0 0.0
        %724 = vmatpush1.msra.mxu0 0.0
        %725 = vmatprep.subr.mxu0 0.0
        %726 = vmatpush1.msra.mxu0 0.0
        %727 = vmatprep.subr.mxu0 0.0
        %728 = vmatpush1.msra.mxu0 0.0
        %729 = vmatprep.subr.mxu0 0.0
        %730 = vmatpush1.msra.mxu0 0.0
        %731 = vmatprep.subr.mxu0 0.0
        %732 = vmatpush1.msra.mxu0 0.0
        %733 = vmatprep.subr.mxu0 0.0
        %734 = vmatpush1.msra.mxu0 0.0
        %735 = vmatprep.subr.mxu0 0.0
        %736 = vmatpush1.msra.mxu0 0.0
        %737 = vmatprep.subr.mxu0 0.0
        %738 = vmatpush1.msra.mxu0 0.0
        %739 = vmatprep.mubr.f32.mxu0 0.0
        %740 = vmatmul.mubr.f32.gmra.mrb[0].mxu0 %v673
        %v741 = vpop.f32.mrb[0].mxu0
        %v742 = vadd.f32 0.0, %v741
        %v743 = vpop.f32.mrb[0].mxu0
        %744 = vdwg.mxu0
        %745 = vst.msk [vmem:[#allocation4] sm:$0xff] %vm578, %v742
        %v746 = vld [vmem:[#allocation2] sm:$0xff]
        %v747 = vld [vmem:[#allocation3] sm:$0xff]
        %749 = vrot.lane.b32.xlu0 %v746, 120
        %v750 = vpop.permute.xlu0 %749
        %752 = vrot.lane.b32.xlu0 %v747, 120
        %v753 = vpop.permute.xlu0 %752
        %v754 = vsel %vm578, %v750, 0
        %v756 = vsel %vm578, %v753, 0
        %758 = vmatprep.subr.mxu0 0.0
        %759 = vmatpush1.xpose.msra.mxu0 %v756
        %760 = vmatprep.subr.mxu0 0.0
        %761 = vmatpush1.xpose.msra.mxu0 0.0
        %762 = vmatprep.subr.mxu0 0.0
        %763 = vmatpush1.xpose.msra.mxu0 0.0
        %764 = vmatprep.subr.mxu0 0.0
        %765 = vmatpush1.xpose.msra.mxu0 0.0
        %766 = vmatprep.subr.mxu0 0.0
        %767 = vmatpush1.xpose.msra.mxu0 0.0
        %768 = vmatprep.subr.mxu0 0.0
        %769 = vmatpush1.xpose.msra.mxu0 0.0
        %770 = vmatprep.subr.mxu0 0.0
        %771 = vmatpush1.xpose.msra.mxu0 0.0
        %772 = vmatprep.subr.mxu0 0.0
        %773 = vmatpush1.xpose.msra.mxu0 0.0
        %774 = vmatprep.subr.mxu0 0.0
        %775 = vmatpush1.xpose.msra.mxu0 0.0
        %776 = vmatprep.subr.mxu0 0.0
        %777 = vmatpush1.xpose.msra.mxu0 0.0
        %778 = vmatprep.subr.mxu0 0.0
        %779 = vmatpush1.xpose.msra.mxu0 0.0
        %780 = vmatprep.subr.mxu0 0.0
        %781 = vmatpush1.xpose.msra.mxu0 0.0
        %782 = vmatprep.subr.mxu0 0.0
        %783 = vmatpush1.xpose.msra.mxu0 0.0
        %784 = vmatprep.subr.mxu0 0.0
        %785 = vmatpush1.xpose.msra.mxu0 0.0
        %786 = vmatprep.subr.mxu0 0.0
        %787 = vmatpush1.xpose.msra.mxu0 0.0
        %788 = vmatprep.subr.mxu0 0.0
        %789 = vmatpush1.xpose.msra.mxu0 0.0
        %790 = vmatprep.subr.mxu0 0.0
        %791 = vmatpush1.xpose.msra.mxu0 0.0
        %792 = vmatprep.subr.mxu0 0.0
        %793 = vmatpush1.xpose.msra.mxu0 0.0
        %794 = vmatprep.subr.mxu0 0.0
        %795 = vmatpush1.xpose.msra.mxu0 0.0
        %796 = vmatprep.subr.mxu0 0.0
        %797 = vmatpush1.xpose.msra.mxu0 0.0
        %798 = vmatprep.subr.mxu0 0.0
        %799 = vmatpush1.xpose.msra.mxu0 0.0
        %800 = vmatprep.subr.mxu0 0.0
        %801 = vmatpush1.xpose.msra.mxu0 0.0
        %802 = vmatprep.subr.mxu0 0.0
        %803 = vmatpush1.xpose.msra.mxu0 0.0
        %804 = vmatprep.subr.mxu0 0.0
        %805 = vmatpush1.xpose.msra.mxu0 0.0
        %806 = vmatprep.subr.mxu0 0.0
        %807 = vmatpush1.xpose.msra.mxu0 0.0
        %808 = vmatprep.subr.mxu0 0.0
        %809 = vmatpush1.xpose.msra.mxu0 0.0
        %810 = vmatprep.subr.mxu0 0.0
        %811 = vmatpush1.xpose.msra.mxu0 0.0
        %812 = vmatprep.subr.mxu0 0.0
        %813 = vmatpush1.xpose.msra.mxu0 0.0
        %814 = vmatprep.subr.mxu0 0.0
        %815 = vmatpush1.xpose.msra.mxu0 0.0
        %816 = vmatprep.subr.mxu0 0.0
        %817 = vmatpush1.xpose.msra.mxu0 0.0
        %818 = vmatprep.subr.mxu0 0.0
        %819 = vmatpush1.xpose.msra.mxu0 0.0
        %820 = vmatprep.subr.mxu0 0.0
        %821 = vmatpush1.xpose.msra.mxu0 0.0
        %822 = vmatprep.mubr.f32.mxu0 0.0
        %823 = vmatmul.mubr.f32.gmra.mrb[0].mxu0 %v754
        %v824 = vpop.f32.mrb[0].mxu0
        %v825 = vadd.f32 0.0, %v824
        %v826 = vpop.f32.mrb[0].mxu0
        %827 = vdwg.mxu0
        %v828 = vsel %vm578, %v825, -inf
        %829 = vmax.xlane.f32.xlu0 %v828
        %v830 = vpop.xlane.xlu0 %829
        %v831 = vsub.f32 %v825, %v830
        %v832 = vmul.f32 %v831, 1.442695
        %v833 = vpow.pop %v832
        %v834 = vsel %vm578, %v833, 0.0
        %835 = vadd.xlane.f32.xlu0 %v834
        %v836 = vpop.xlane.xlu0 %835
        %v837 = vrcp.pop %v836
        %v838 = vmul.f32 %v836, %v837
        %v839 = vsub.f32 2.0, %v838
        %v840 = vmul.f32 %v837, %v839
        %v841 = vmul.f32 %v833, %v840
        %842 = vrot.lane.b32.xlu0 %v747, 88
        %v843 = vpop.permute.xlu0 %842
        %v846 = vsel %vm578, %v841, 0
        %848 = vmatprep.subr.mxu0 0.0
        %849 = vmatpush1.msra.mxu0 %v843
        %850 = vmatprep.subr.mxu0 0.0
        %851 = vmatpush1.msra.mxu0 0.0
        %852 = vmatprep.subr.mxu0 0.0
        %853 = vmatpush1.msra.mxu0 0.0
        %854 = vmatprep.subr.mxu0 0.0
        %855 = vmatpush1.msra.mxu0 0.0
        %856 = vmatprep.subr.mxu0 0.0
        %857 = vmatpush1.msra.mxu0 0.0
        %858 = vmatprep.subr.mxu0 0.0
        %859 = vmatpush1.msra.mxu0 0.0
        %860 = vmatprep.subr.mxu0 0.0
        %861 = vmatpush1.msra.mxu0 0.0
        %862 = vmatprep.subr.mxu0 0.0
        %863 = vmatpush1.msra.mxu0 0.0
        %864 = vmatprep.subr.mxu0 0.0
        %865 = vmatpush1.msra.mxu0 0.0
        %866 = vmatprep.subr.mxu0 0.0
        %867 = vmatpush1.msra.mxu0 0.0
        %868 = vmatprep.subr.mxu0 0.0
        %869 = vmatpush1.msra.mxu0 0.0
        %870 = vmatprep.subr.mxu0 0.0
        %871 = vmatpush1.msra.mxu0 0.0
        %872 = vmatprep.subr.mxu0 0.0
        %873 = vmatpush1.msra.mxu0 0.0
        %874 = vmatprep.subr.mxu0 0.0
        %875 = vmatpush1.msra.mxu0 0.0
        %876 = vmatprep.subr.mxu0 0.0
        %877 = vmatpush1.msra.mxu0 0.0
        %878 = vmatprep.subr.mxu0 0.0
        %879 = vmatpush1.msra.mxu0 0.0
        %880 = vmatprep.subr.mxu0 0.0
        %881 = vmatpush1.msra.mxu0 0.0
        %882 = vmatprep.subr.mxu0 0.0
        %883 = vmatpush1.msra.mxu0 0.0
        %884 = vmatprep.subr.mxu0 0.0
        %885 = vmatpush1.msra.mxu0 0.0
        %886 = vmatprep.subr.mxu0 0.0
        %887 = vmatpush1.msra.mxu0 0.0
        %888 = vmatprep.subr.mxu0 0.0
        %889 = vmatpush1.msra.mxu0 0.0
        %890 = vmatprep.subr.mxu0 0.0
        %891 = vmatpush1.msra.mxu0 0.0
        %892 = vmatprep.subr.mxu0 0.0
        %893 = vmatpush1.msra.mxu0 0.0
        %894 = vmatprep.subr.mxu0 0.0
        %895 = vmatpush1.msra.mxu0 0.0
        %896 = vmatprep.subr.mxu0 0.0
        %897 = vmatpush1.msra.mxu0 0.0
        %898 = vmatprep.subr.mxu0 0.0
        %899 = vmatpush1.msra.mxu0 0.0
        %900 = vmatprep.subr.mxu0 0.0
        %901 = vmatpush1.msra.mxu0 0.0
        %902 = vmatprep.subr.mxu0 0.0
        %903 = vmatpush1.msra.mxu0 0.0
        %904 = vmatprep.subr.mxu0 0.0
        %905 = vmatpush1.msra.mxu0 0.0
        %906 = vmatprep.subr.mxu0 0.0
        %907 = vmatpush1.msra.mxu0 0.0
        %908 = vmatprep.subr.mxu0 0.0
        %909 = vmatpush1.msra.mxu0 0.0
        %910 = vmatprep.subr.mxu0 0.0
        %911 = vmatpush1.msra.mxu0 0.0
        %912 = vmatprep.mubr.f32.mxu0 0.0
        %913 = vmatmul.mubr.f32.gmra.mrb[0].mxu0 %v846
        %v914 = vpop.f32.mrb[0].mxu0
        %v915 = vadd.f32 0.0, %v914
        %v916 = vpop.f32.mrb[0].mxu0
        %917 = vdwg.mxu0
        %919 = vrot.lane.b32.xlu0 %v915, 8
        %v920 = vpop.permute.xlu0 %919
        %vm922 = vcmask 130112
        %923 = vst.msk [vmem:[#allocation4] sm:$0xff] %vm922, %v920
        %v924 = vld [vmem:[#allocation2] sm:$0xff]
        %v925 = vld [vmem:[#allocation3] sm:$0xff]
        %927 = vrot.lane.b32.xlu0 %v924, 112
        %v928 = vpop.permute.xlu0 %927
        %930 = vrot.lane.b32.xlu0 %v925, 112
        %v931 = vpop.permute.xlu0 %930
        %v932 = vsel %vm578, %v928, 0
        %v934 = vsel %vm578, %v931, 0
        %936 = vmatprep.subr.mxu0 0.0
        %937 = vmatpush1.xpose.msra.mxu0 %v934
        %938 = vmatprep.subr.mxu0 0.0
        %939 = vmatpush1.xpose.msra.mxu0 0.0
        %940 = vmatprep.subr.mxu0 0.0
        %941 = vmatpush1.xpose.msra.mxu0 0.0
        %942 = vmatprep.subr.mxu0 0.0
        %943 = vmatpush1.xpose.msra.mxu0 0.0
        %944 = vmatprep.subr.mxu0 0.0
        %945 = vmatpush1.xpose.msra.mxu0 0.0
        %946 = vmatprep.subr.mxu0 0.0
        %947 = vmatpush1.xpose.msra.mxu0 0.0
        %948 = vmatprep.subr.mxu0 0.0
        %949 = vmatpush1.xpose.msra.mxu0 0.0
        %950 = vmatprep.subr.mxu0 0.0
        %951 = vmatpush1.xpose.msra.mxu0 0.0
        %952 = vmatprep.subr.mxu0 0.0
        %953 = vmatpush1.xpose.msra.mxu0 0.0
        %954 = vmatprep.subr.mxu0 0.0
        %955 = vmatpush1.xpose.msra.mxu0 0.0
        %956 = vmatprep.subr.mxu0 0.0
        %957 = vmatpush1.xpose.msra.mxu0 0.0
        %958 = vmatprep.subr.mxu0 0.0
        %959 = vmatpush1.xpose.msra.mxu0 0.0
        %960 = vmatprep.subr.mxu0 0.0
        %961 = vmatpush1.xpose.msra.mxu0 0.0
        %962 = vmatprep.subr.mxu0 0.0
        %963 = vmatpush1.xpose.msra.mxu0 0.0
        %964 = vmatprep.subr.mxu0 0.0
        %965 = vmatpush1.xpose.msra.mxu0 0.0
        %966 = vmatprep.subr.mxu0 0.0
        %967 = vmatpush1.xpose.msra.mxu0 0.0
        %968 = vmatprep.subr.mxu0 0.0
        %969 = vmatpush1.xpose.msra.mxu0 0.0
        %970 = vmatprep.subr.mxu0 0.0
        %971 = vmatpush1.xpose.msra.mxu0 0.0
        %972 = vmatprep.subr.mxu0 0.0
        %973 = vmatpush1.xpose.msra.mxu0 0.0
        %974 = vmatprep.subr.mxu0 0.0
        %975 = vmatpush1.xpose.msra.mxu0 0.0
        %976 = vmatprep.subr.mxu0 0.0
        %977 = vmatpush1.xpose.msra.mxu0 0.0
        %978 = vmatprep.subr.mxu0 0.0
        %979 = vmatpush1.xpose.msra.mxu0 0.0
        %980 = vmatprep.subr.mxu0 0.0
        %981 = vmatpush1.xpose.msra.mxu0 0.0
        %982 = vmatprep.subr.mxu0 0.0
        %983 = vmatpush1.xpose.msra.mxu0 0.0
        %984 = vmatprep.subr.mxu0 0.0
        %985 = vmatpush1.xpose.msra.mxu0 0.0
        %986 = vmatprep.subr.mxu0 0.0
        %987 = vmatpush1.xpose.msra.mxu0 0.0
        %988 = vmatprep.subr.mxu0 0.0
        %989 = vmatpush1.xpose.msra.mxu0 0.0
        %990 = vmatprep.subr.mxu0 0.0
        %991 = vmatpush1.xpose.msra.mxu0 0.0
        %992 = vmatprep.subr.mxu0 0.0
        %993 = vmatpush1.xpose.msra.mxu0 0.0
        %994 = vmatprep.subr.mxu0 0.0
        %995 = vmatpush1.xpose.msra.mxu0 0.0
        %996 = vmatprep.subr.mxu0 0.0
        %997 = vmatpush1.xpose.msra.mxu0 0.0
        %998 = vmatprep.subr.mxu0 0.0
        %999 = vmatpush1.xpose.msra.mxu0 0.0
        %1000 = vmatprep.mubr.f32.mxu0 0.0
        %1001 = vmatmul.mubr.f32.gmra.mrb[0].mxu0 %v932
        %v1002 = vpop.f32.mrb[0].mxu0
        %v1003 = vadd.f32 0.0, %v1002
        %v1004 = vpop.f32.mrb[0].mxu0
        %1005 = vdwg.mxu0
        %v1006 = vsel %vm578, %v1003, -inf
        %1007 = vmax.xlane.f32.xlu0 %v1006
        %v1008 = vpop.xlane.xlu0 %1007
        %v1009 = vsub.f32 %v1003, %v1008
        %v1010 = vmul.f32 %v1009, 1.442695
        %v1011 = vpow.pop %v1010
        %v1012 = vsel %vm578, %v1011, 0.0
        %1013 = vadd.xlane.f32.xlu0 %v1012
        %v1014 = vpop.xlane.xlu0 %1013
        %v1015 = vrcp.pop %v1014
        %v1016 = vmul.f32 %v1014, %v1015
        %v1017 = vsub.f32 2.0, %v1016
        %v1018 = vmul.f32 %v1015, %v1017
        %v1019 = vmul.f32 %v1011, %v1018
        %1020 = vrot.lane.b32.xlu0 %v925, 80
        %v1021 = vpop.permute.xlu0 %1020
        %v1024 = vsel %vm578, %v1019, 0
        %1026 = vmatprep.subr.mxu0 0.0
        %1027 = vmatpush1.msra.mxu0 %v1021
        %1028 = vmatprep.subr.mxu0 0.0
        %1029 = vmatpush1.msra.mxu0 0.0
        %1030 = vmatprep.subr.mxu0 0.0
        %1031 = vmatpush1.msra.mxu0 0.0
        %1032 = vmatprep.subr.mxu0 0.0
        %1033 = vmatpush1.msra.mxu0 0.0
        %1034 = vmatprep.subr.mxu0 0.0
        %1035 = vmatpush1.msra.mxu0 0.0
        %1036 = vmatprep.subr.mxu0 0.0
        %1037 = vmatpush1.msra.mxu0 0.0
        %1038 = vmatprep.subr.mxu0 0.0
        %1039 = vmatpush1.msra.mxu0 0.0
        %1040 = vmatprep.subr.mxu0 0.0
        %1041 = vmatpush1.msra.mxu0 0.0
        %1042 = vmatprep.subr.mxu0 0.0
        %1043 = vmatpush1.msra.mxu0 0.0
        %1044 = vmatprep.subr.mxu0 0.0
        %1045 = vmatpush1.msra.mxu0 0.0
        %1046 = vmatprep.subr.mxu0 0.0
        %1047 = vmatpush1.msra.mxu0 0.0
        %1048 = vmatprep.subr.mxu0 0.0
        %1049 = vmatpush1.msra.mxu0 0.0
        %1050 = vmatprep.subr.mxu0 0.0
        %1051 = vmatpush1.msra.mxu0 0.0
        %1052 = vmatprep.subr.mxu0 0.0
        %1053 = vmatpush1.msra.mxu0 0.0
        %1054 = vmatprep.subr.mxu0 0.0
        %1055 = vmatpush1.msra.mxu0 0.0
        %1056 = vmatprep.subr.mxu0 0.0
        %1057 = vmatpush1.msra.mxu0 0.0
        %1058 = vmatprep.subr.mxu0 0.0
        %1059 = vmatpush1.msra.mxu0 0.0
        %1060 = vmatprep.subr.mxu0 0.0
        %1061 = vmatpush1.msra.mxu0 0.0
        %1062 = vmatprep.subr.mxu0 0.0
        %1063 = vmatpush1.msra.mxu0 0.0
        %1064 = vmatprep.subr.mxu0 0.0
        %1065 = vmatpush1.msra.mxu0 0.0
        %1066 = vmatprep.subr.mxu0 0.0
        %1067 = vmatpush1.msra.mxu0 0.0
        %1068 = vmatprep.subr.mxu0 0.0
        %1069 = vmatpush1.msra.mxu0 0.0
        %1070 = vmatprep.subr.mxu0 0.0
        %1071 = vmatpush1.msra.mxu0 0.0
        %1072 = vmatprep.subr.mxu0 0.0
        %1073 = vmatpush1.msra.mxu0 0.0
        %1074 = vmatprep.subr.mxu0 0.0
        %1075 = vmatpush1.msra.mxu0 0.0
        %1076 = vmatprep.subr.mxu0 0.0
        %1077 = vmatpush1.msra.mxu0 0.0
        %1078 = vmatprep.subr.mxu0 0.0
        %1079 = vmatpush1.msra.mxu0 0.0
        %1080 = vmatprep.subr.mxu0 0.0
        %1081 = vmatpush1.msra.mxu0 0.0
        %1082 = vmatprep.subr.mxu0 0.0
        %1083 = vmatpush1.msra.mxu0 0.0
        %1084 = vmatprep.subr.mxu0 0.0
        %1085 = vmatpush1.msra.mxu0 0.0
        %1086 = vmatprep.subr.mxu0 0.0
        %1087 = vmatpush1.msra.mxu0 0.0
        %1088 = vmatprep.subr.mxu0 0.0
        %1089 = vmatpush1.msra.mxu0 0.0
        %1090 = vmatprep.mubr.f32.mxu0 0.0
        %1091 = vmatmul.mubr.f32.gmra.mrb[0].mxu0 %v1024
        %v1092 = vpop.f32.mrb[0].mxu0
        %v1093 = vadd.f32 0.0, %v1092
        %v1094 = vpop.f32.mrb[0].mxu0
        %1095 = vdwg.mxu0
        %1097 = vrot.lane.b32.xlu0 %v1093, 16
        %v1098 = vpop.permute.xlu0 %1097
        %vm1100 = vcmask 195712
        %1101 = vst.msk [vmem:[#allocation4] sm:$0xff] %vm1100, %v1098
        %v1102 = vld [vmem:[#allocation2] sm:$0xff]
        %v1103 = vld [vmem:[#allocation3] sm:$0xff]
        %1105 = vrot.lane.b32.xlu0 %v1102, 104
        %v1106 = vpop.permute.xlu0 %1105
        %1108 = vrot.lane.b32.xlu0 %v1103, 104
        %v1109 = vpop.permute.xlu0 %1108
        %v1110 = vsel %vm578, %v1106, 0
        %v1112 = vsel %vm578, %v1109, 0
        %1114 = vmatprep.subr.mxu0 0.0
        %1115 = vmatpush1.xpose.msra.mxu0 %v1112
        %1116 = vmatprep.subr.mxu0 0.0
        %1117 = vmatpush1.xpose.msra.mxu0 0.0
        %1118 = vmatprep.subr.mxu0 0.0
        %1119 = vmatpush1.xpose.msra.mxu0 0.0
        %1120 = vmatprep.subr.mxu0 0.0
        %1121 = vmatpush1.xpose.msra.mxu0 0.0
        %1122 = vmatprep.subr.mxu0 0.0
        %1123 = vmatpush1.xpose.msra.mxu0 0.0
        %1124 = vmatprep.subr.mxu0 0.0
        %1125 = vmatpush1.xpose.msra.mxu0 0.0
        %1126 = vmatprep.subr.mxu0 0.0
        %1127 = vmatpush1.xpose.msra.mxu0 0.0
        %1128 = vmatprep.subr.mxu0 0.0
        %1129 = vmatpush1.xpose.msra.mxu0 0.0
        %1130 = vmatprep.subr.mxu0 0.0
        %1131 = vmatpush1.xpose.msra.mxu0 0.0
        %1132 = vmatprep.subr.mxu0 0.0
        %1133 = vmatpush1.xpose.msra.mxu0 0.0
        %1134 = vmatprep.subr.mxu0 0.0
        %1135 = vmatpush1.xpose.msra.mxu0 0.0
        %1136 = vmatprep.subr.mxu0 0.0
        %1137 = vmatpush1.xpose.msra.mxu0 0.0
        %1138 = vmatprep.subr.mxu0 0.0
        %1139 = vmatpush1.xpose.msra.mxu0 0.0
        %1140 = vmatprep.subr.mxu0 0.0
        %1141 = vmatpush1.xpose.msra.mxu0 0.0
        %1142 = vmatprep.subr.mxu0 0.0
        %1143 = vmatpush1.xpose.msra.mxu0 0.0
        %1144 = vmatprep.subr.mxu0 0.0
        %1145 = vmatpush1.xpose.msra.mxu0 0.0
        %1146 = vmatprep.subr.mxu0 0.0
        %1147 = vmatpush1.xpose.msra.mxu0 0.0
        %1148 = vmatprep.subr.mxu0 0.0
        %1149 = vmatpush1.xpose.msra.mxu0 0.0
        %1150 = vmatprep.subr.mxu0 0.0
        %1151 = vmatpush1.xpose.msra.mxu0 0.0
        %1152 = vmatprep.subr.mxu0 0.0
        %1153 = vmatpush1.xpose.msra.mxu0 0.0
        %1154 = vmatprep.subr.mxu0 0.0
        %1155 = vmatpush1.xpose.msra.mxu0 0.0
        %1156 = vmatprep.subr.mxu0 0.0
        %1157 = vmatpush1.xpose.msra.mxu0 0.0
        %1158 = vmatprep.subr.mxu0 0.0
        %1159 = vmatpush1.xpose.msra.mxu0 0.0
        %1160 = vmatprep.subr.mxu0 0.0
        %1161 = vmatpush1.xpose.msra.mxu0 0.0
        %1162 = vmatprep.subr.mxu0 0.0
        %1163 = vmatpush1.xpose.msra.mxu0 0.0
        %1164 = vmatprep.subr.mxu0 0.0
        %1165 = vmatpush1.xpose.msra.mxu0 0.0
        %1166 = vmatprep.subr.mxu0 0.0
        %1167 = vmatpush1.xpose.msra.mxu0 0.0
        %1168 = vmatprep.subr.mxu0 0.0
        %1169 = vmatpush1.xpose.msra.mxu0 0.0
        %1170 = vmatprep.subr.mxu0 0.0
        %1171 = vmatpush1.xpose.msra.mxu0 0.0
        %1172 = vmatprep.subr.mxu0 0.0
        %1173 = vmatpush1.xpose.msra.mxu0 0.0
        %1174 = vmatprep.subr.mxu0 0.0
        %1175 = vmatpush1.xpose.msra.mxu0 0.0
        %1176 = vmatprep.subr.mxu0 0.0
        %1177 = vmatpush1.xpose.msra.mxu0 0.0
        %1178 = vmatprep.mubr.f32.mxu0 0.0
        %1179 = vmatmul.mubr.f32.gmra.mrb[0].mxu0 %v1110
        %v1180 = vpop.f32.mrb[0].mxu0
        %v1181 = vadd.f32 0.0, %v1180
        %v1182 = vpop.f32.mrb[0].mxu0
        %1183 = vdwg.mxu0
        %v1184 = vsel %vm578, %v1181, -inf
        %1185 = vmax.xlane.f32.xlu0 %v1184
        %v1186 = vpop.xlane.xlu0 %1185
        %v1187 = vsub.f32 %v1181, %v1186
        %v1188 = vmul.f32 %v1187, 1.442695
        %v1189 = vpow.pop %v1188
        %v1190 = vsel %vm578, %v1189, 0.0
        %1191 = vadd.xlane.f32.xlu0 %v1190
        %v1192 = vpop.xlane.xlu0 %1191
        %v1193 = vrcp.pop %v1192
        %v1194 = vmul.f32 %v1192, %v1193
        %v1195 = vsub.f32 2.0, %v1194
        %v1196 = vmul.f32 %v1193, %v1195
        %v1197 = vmul.f32 %v1189, %v1196
        %1198 = vrot.lane.b32.xlu0 %v1103, 72
        %v1199 = vpop.permute.xlu0 %1198
        %v1202 = vsel %vm578, %v1197, 0
        %1204 = vmatprep.subr.mxu0 0.0
        %1205 = vmatpush1.msra.mxu0 %v1199
        %1206 = vmatprep.subr.mxu0 0.0
        %1207 = vmatpush1.msra.mxu0 0.0
        %1208 = vmatprep.subr.mxu0 0.0
        %1209 = vmatpush1.msra.mxu0 0.0
        %1210 = vmatprep.subr.mxu0 0.0
        %1211 = vmatpush1.msra.mxu0 0.0
        %1212 = vmatprep.subr.mxu0 0.0
        %1213 = vmatpush1.msra.mxu0 0.0
        %1214 = vmatprep.subr.mxu0 0.0
        %1215 = vmatpush1.msra.mxu0 0.0
        %1216 = vmatprep.subr.mxu0 0.0
        %1217 = vmatpush1.msra.mxu0 0.0
        %1218 = vmatprep.subr.mxu0 0.0
        %1219 = vmatpush1.msra.mxu0 0.0
        %1220 = vmatprep.subr.mxu0 0.0
        %1221 = vmatpush1.msra.mxu0 0.0
        %1222 = vmatprep.subr.mxu0 0.0
        %1223 = vmatpush1.msra.mxu0 0.0
        %1224 = vmatprep.subr.mxu0 0.0
        %1225 = vmatpush1.msra.mxu0 0.0
        %1226 = vmatprep.subr.mxu0 0.0
        %1227 = vmatpush1.msra.mxu0 0.0
        %1228 = vmatprep.subr.mxu0 0.0
        %1229 = vmatpush1.msra.mxu0 0.0
        %1230 = vmatprep.subr.mxu0 0.0
        %1231 = vmatpush1.msra.mxu0 0.0
        %1232 = vmatprep.subr.mxu0 0.0
        %1233 = vmatpush1.msra.mxu0 0.0
        %1234 = vmatprep.subr.mxu0 0.0
        %1235 = vmatpush1.msra.mxu0 0.0
        %1236 = vmatprep.subr.mxu0 0.0
        %1237 = vmatpush1.msra.mxu0 0.0
        %1238 = vmatprep.subr.mxu0 0.0
        %1239 = vmatpush1.msra.mxu0 0.0
        %1240 = vmatprep.subr.mxu0 0.0
        %1241 = vmatpush1.msra.mxu0 0.0
        %1242 = vmatprep.subr.mxu0 0.0
        %1243 = vmatpush1.msra.mxu0 0.0
        %1244 = vmatprep.subr.mxu0 0.0
        %1245 = vmatpush1.msra.mxu0 0.0
        %1246 = vmatprep.subr.mxu0 0.0
        %1247 = vmatpush1.msra.mxu0 0.0
        %1248 = vmatprep.subr.mxu0 0.0
        %1249 = vmatpush1.msra.mxu0 0.0
        %1250 = vmatprep.subr.mxu0 0.0
        %1251 = vmatpush1.msra.mxu0 0.0
        %1252 = vmatprep.subr.mxu0 0.0
        %1253 = vmatpush1.msra.mxu0 0.0
        %1254 = vmatprep.subr.mxu0 0.0
        %1255 = vmatpush1.msra.mxu0 0.0
        %1256 = vmatprep.subr.mxu0 0.0
        %1257 = vmatpush1.msra.mxu0 0.0
        %1258 = vmatprep.subr.mxu0 0.0
        %1259 = vmatpush1.msra.mxu0 0.0
        %1260 = vmatprep.subr.mxu0 0.0
        %1261 = vmatpush1.msra.mxu0 0.0
        %1262 = vmatprep.subr.mxu0 0.0
        %1263 = vmatpush1.msra.mxu0 0.0
        %1264 = vmatprep.subr.mxu0 0.0
        %1265 = vmatpush1.msra.mxu0 0.0
        %1266 = vmatprep.subr.mxu0 0.0
        %1267 = vmatpush1.msra.mxu0 0.0
        %1268 = vmatprep.mubr.f32.mxu0 0.0
        %1269 = vmatmul.mubr.f32.gmra.mrb[0].mxu0 %v1202
        %v1270 = vpop.f32.mrb[0].mxu0
        %v1271 = vadd.f32 0.0, %v1270
        %v1272 = vpop.f32.mrb[0].mxu0
        %1273 = vdwg.mxu0
        %1275 = vrot.lane.b32.xlu0 %v1271, 24
        %v1276 = vpop.permute.xlu0 %1275
        %vm1278 = vcmask 261312
        %1279 = vst.msk [vmem:[#allocation4] sm:$0xff] %vm1278, %v1276
        %v1280 = vld [vmem:[#allocation4] sm:$0xff]
        %v1281 = vld [vmem:[#allocation13] sm:$0xff]
        %v1282 = vld [vmem:[#allocation13 + $0x8] sm:$0xff]
        %v1283 = vld [vmem:[#allocation13 + $0x10] sm:$0xff]
        %v1284 = vld [vmem:[#allocation13 + $0x18] sm:$0xff]
        %v1285 = vld [vmem:[%s7] sm:$0x1]
        %v1287 = vlaneseq
        %v1288 = vshrl.u32 %v1287, 7
        %v1289 = vsub.s32 0, %v1288
        %v1290 = vrot.slane %v1285, %v1289
        %v1293 = vsel %vm414, %v1280, 0
        %1295 = vmatprep.subr.mxu0 0.0
        %1296 = vmatpush1.msra.mxu0 %v1281
        %1297 = vmatprep.subr.mxu0 0.0
        %1298 = vmatpush1.msra.mxu0 %v1282
        %1299 = vmatprep.subr.mxu0 0.0
        %1300 = vmatpush1.msra.mxu0 %v1283
        %1301 = vmatprep.subr.mxu0 0.0
        %1302 = vmatpush1.msra.mxu0 %v1284
        %1303 = vmatprep.subr.mxu0 0.0
        %1304 = vmatpush1.msra.mxu0 0.0
        %1305 = vmatprep.subr.mxu0 0.0
        %1306 = vmatpush1.msra.mxu0 0.0
        %1307 = vmatprep.subr.mxu0 0.0
        %1308 = vmatpush1.msra.mxu0 0.0
        %1309 = vmatprep.subr.mxu0 0.0
        %1310 = vmatpush1.msra.mxu0 0.0
        %1311 = vmatprep.subr.mxu0 0.0
        %1312 = vmatpush1.msra.mxu0 0.0
        %1313 = vmatprep.subr.mxu0 0.0
        %1314 = vmatpush1.msra.mxu0 0.0
        %1315 = vmatprep.subr.mxu0 0.0
        %1316 = vmatpush1.msra.mxu0 0.0
        %1317 = vmatprep.subr.mxu0 0.0
        %1318 = vmatpush1.msra.mxu0 0.0
        %1319 = vmatprep.subr.mxu0 0.0
        %1320 = vmatpush1.msra.mxu0 0.0
        %1321 = vmatprep.subr.mxu0 0.0
        %1322 = vmatpush1.msra.mxu0 0.0
        %1323 = vmatprep.subr.mxu0 0.0
        %1324 = vmatpush1.msra.mxu0 0.0
        %1325 = vmatprep.subr.mxu0 0.0
        %1326 = vmatpush1.msra.mxu0 0.0
        %1327 = vmatprep.subr.mxu0 0.0
        %1328 = vmatpush1.msra.mxu0 0.0
        %1329 = vmatprep.subr.mxu0 0.0
        %1330 = vmatpush1.msra.mxu0 0.0
        %1331 = vmatprep.subr.mxu0 0.0
        %1332 = vmatpush1.msra.mxu0 0.0
        %1333 = vmatprep.subr.mxu0 0.0
        %1334 = vmatpush1.msra.mxu0 0.0
        %1335 = vmatprep.subr.mxu0 0.0
        %1336 = vmatpush1.msra.mxu0 0.0
        %1337 = vmatprep.subr.mxu0 0.0
        %1338 = vmatpush1.msra.mxu0 0.0
        %1339 = vmatprep.subr.mxu0 0.0
        %1340 = vmatpush1.msra.mxu0 0.0
        %1341 = vmatprep.subr.mxu0 0.0
        %1342 = vmatpush1.msra.mxu0 0.0
        %1343 = vmatprep.subr.mxu0 0.0
        %1344 = vmatpush1.msra.mxu0 0.0
        %1345 = vmatprep.subr.mxu0 0.0
        %1346 = vmatpush1.msra.mxu0 0.0
        %1347 = vmatprep.subr.mxu0 0.0
        %1348 = vmatpush1.msra.mxu0 0.0
        %1349 = vmatprep.subr.mxu0 0.0
        %1350 = vmatpush1.msra.mxu0 0.0
        %1351 = vmatprep.subr.mxu0 0.0
        %1352 = vmatpush1.msra.mxu0 0.0
        %1353 = vmatprep.subr.mxu0 0.0
        %1354 = vmatpush1.msra.mxu0 0.0
        %1355 = vmatprep.subr.mxu0 0.0
        %1356 = vmatpush1.msra.mxu0 0.0
        %1357 = vmatprep.subr.mxu0 0.0
        %1358 = vmatpush1.msra.mxu0 0.0
        %1359 = vmatprep.mubr.f32.mxu0 0.0
        %1360 = vmatmul.mubr.f32.gmra.mrb[0].mxu0 %v1293
        %v1361 = vpop.f32.mrb[0].mxu0
        %v1362 = vadd.f32 %v1290, %v1361
        %v1363 = vpop.f32.mrb[0].mxu0
        %1364 = vdwg.mxu0
        %1365 = vst.msk [vmem:[%s400] sm:$0xff] %vm414, %v1362
        %s1366 = sand.u32 %s215, 1
        %s1367 = scalar_lea.sflag [#allocation7], %s1366
        %s1368 = sand.u32 %s215, 1
        %s1369 = smul.addr %s1368, 8
        %s1370 = scalar_lea.vmem [#allocation14], %s1369
        // Predicated region
        $region73: #{tpu_custom_call.1} parent=51 // pred_check
          %p1371 = pneg %p225
        $region74: #{tpu_custom_call.1} parent=51 // pred_check_branch
          %1373 = sbr.rel (%p1371) target = $region76
        $region75: #{tpu_custom_call.1} parent=51 // pred_region
          %s1375 = ssub.s32 128, 128
          %1376 = vsyncadd %s1367, %s1375
          %s1377 = smul.addr %s29, 128
          %s1378 = scalar_lea.hbm %s8, %s1377
          %s1380 = sshll.u32 %s1370, 4
          %s1381 = int_to_ptr.vmem [resolvable:$true] %s1380
          %1383 = dma.vmem_to_hbm [thread:$0]  %s1381, 128, %s1378, %s1367
        $region76: #{tpu_custom_call.1} parent=51 // pred_fallthru
          _
      $region52: #{tpu_custom_call.1} parent=5 // pred_fallthru
        _
      %p1384 = scmp.le.s32.totalorder 2, %s24
      // Predicated region
      $region77: #{tpu_custom_call.1} parent=5 // pred_check
        %p1385 = pneg %p1384
      $region78: #{tpu_custom_call.1} parent=5 // pred_check_branch
        %1387 = sbr.rel (%p1385) target = $region80
      $region79: #{tpu_custom_call.1} parent=5 // pred_region
        %s1388 = ssub.s32 %s24, 2
        // Predicated region
        $region81: #{tpu_custom_call.1} parent=79 // pred_check
          %p1389 = pneg %p231
        $region82: #{tpu_custom_call.1} parent=79 // pred_check_branch
          %1391 = sbr.rel (%p1389) target = $region84
        $region83: #{tpu_custom_call.1} parent=79 // pred_region
          %s1392 = sand.u32 %s216, 1
          %s1393 = scalar_lea.sflag [#allocation7], %s1392
          %s1394 = sand.u32 %s216, 1
          %s1395 = smul.addr %s1394, 8
          %s1396 = scalar_lea.vmem [#allocation14], %s1395
          %1397 = dma.done %s1393, 128
        $region84: #{tpu_custom_call.1} parent=79 // pred_fallthru
          _
      $region80: #{tpu_custom_call.1} parent=5 // pred_fallthru
        _
    $region6: #{tpu_custom_call.1} parent=1 // loop_footer
      %s28 = sadd.s32 1, %s24
    $region7: #{tpu_custom_call.1} parent=1 // loop_footer_branch
      %23 = sbr.rel target = $region3
    $region8: #{tpu_custom_call.1} parent=1 // loop_exit
      _
    %1398 = vsyncpa [#allocation6], 1
    %s1399 = scalar_lea.sflag [#allocation6], 1
    %1400 = vsyncpa %s1399, 1
    %1401 = vsyncpa [#allocation9], 1
    %s1402 = scalar_lea.sflag [#allocation9], 1
    %1403 = vsyncpa %s1402, 1
    %1404 = vsyncpa [#allocation12], 1
    %1405 = vsyncpa [#allocation7], 1
    %s1406 = scalar_lea.sflag [#allocation7], 1
    %1407 = vsyncpa %s1406, 1

</llo_original>
